<compile_context>
chip_gen: v5e
topology: v5e:2x2
jax: 0.10.0
libtpu: 0.0.40
codegen_flags: <defaults>
</compile_context>

<pallas_src>
import functools
import math

import jax
import jax.numpy as jnp
from jax.experimental import pallas as pl
from jax.experimental.pallas import tpu as pltpu


# ----------------------------------------------------------------------------- kernel
def fused_encoder_kernel(x_ref, neg_ref,
                         w_in_ref, b_in_ref, w_out_ref, b_out_ref,
                         ln1_w_ref, ln1_b_ref,
                         w1_ref, b1_ref, w2_ref, b2_ref,
                         ln2_w_ref, ln2_b_ref,
                         o_ref,
                         ctx_ref,
                         *, n_heads, use_bf16, ffn_chunk, eps=1e-5):
    layer = pl.program_id(1)

    # Layer 0: seed the resident output block with the input activations.  For
    # l > 0 the output block still holds layer l-1's result (same block index
    # across the layer axis -> no HBM traffic in between).
    @pl.when(layer == 0)
    def _():
        o_ref[...] = x_ref[...]

    x = o_ref[...].astype(jnp.float32)            # (TB, S, D) current layer input
    TB, S, D = x.shape
    H = n_heads
    hd = D // H
    M = TB * S
    scale = 1.0 / math.sqrt(float(hd))
    cdt = jnp.bfloat16 if use_bf16 else jnp.float32

    neg = neg_ref[...]                            # (TB, 1, S) additive key bias (0 / -1e30)

    def mm(a, b):
        return jnp.dot(a, b, preferred_element_type=jnp.float32)

    xm = x.reshape(M, D)                          # fold batch into matmul rows
    xc = xm.astype(cdt)                           # one activation cast

    # --- fused QKV projection (weights pre-transposed to (D, 3D)) -------------
    qkv = mm(xc, w_in_ref[0]) + b_in_ref[0, 0]
    q = (qkv[:, :D] * scale).astype(cdt)          # fold 1/sqrt(hd) into q
    k = qkv[:, D:2 * D].astype(cdt)
    v = qkv[:, 2 * D:].astype(cdt)

    # --- multi-head self attention --------------------------------------------
    # Per head (static unroll, H small): batched scores/softmax/context, each
    # head's context written into its lane slice of a VMEM scratch.  The output
    # projection is then ONE (M, D) @ (D, D) matmul with full contraction depth.
    for h in range(H):
        sl = slice(h * hd, (h + 1) * hd)
        qh = q[:, sl].reshape(TB, S, hd)
        kh = k[:, sl].reshape(TB, S, hd)
        vh = v[:, sl].reshape(TB, S, hd)
        s = jnp.einsum('bqd,bkd->bqk', qh, kh,
                       preferred_element_type=jnp.float32) + neg     # (TB, S, S) f32
        s = s - jnp.max(s, axis=-1, keepdims=True)
        p = jnp.exp(s)
        p = p * pl.reciprocal(jnp.sum(p, axis=-1, keepdims=True), approx=True)
        oh = jnp.einsum('bqk,bkd->bqd', p.astype(cdt), vh,
                        preferred_element_type=jnp.float32)          # (TB, S, hd) f32
        ctx_ref[:, sl] = oh.reshape(M, hd)

    attn = mm(ctx_ref[...].astype(cdt), w_out_ref[0]) + b_out_ref[0, 0]

    def layer_norm(z, w, b):
        mu = jnp.mean(z, axis=-1, keepdims=True)
        zc = z - mu
        var = jnp.mean(zc * zc, axis=-1, keepdims=True)              # two-pass variance
        return zc * jax.lax.rsqrt(var + eps) * w + b

    # --- add & norm 1 ----------------------------------------------------------
    x1 = layer_norm(xm + attn, ln1_w_ref[0, 0], ln1_b_ref[0, 0])
    x1c = x1.astype(cdt)

    # --- feed forward, tiled over the hidden dimension --------------------------
    DH = w1_ref.shape[-1]
    ff = jnp.zeros((M, D), jnp.float32)
    for c0 in range(0, DH, ffn_chunk):
        c1 = min(c0 + ffn_chunk, DH)
        h1 = jnp.maximum(mm(x1c, w1_ref[0, :, c0:c1]) + b1_ref[0, 0, c0:c1], 0.0)
        ff = ff + mm(h1.astype(cdt), w2_ref[0, c0:c1, :])
    ff = ff + b2_ref[0, 0]

    # --- add & norm 2 ----------------------------------------------------------
    y = layer_norm(x1 + ff, ln2_w_ref[0, 0], ln2_b_ref[0, 0])
    o_ref[...] = y.reshape(TB, S, D).astype(o_ref.dtype)


# ----------------------------------------------------------------------------- host-side prep / sizing
def prepare_layer_params(p, use_bf16):
    """Pre-transpose nn.Linear-layout (out, in) weights to (in, out) on the host
    so the kernel never transposes; optionally cast matmul weights to bf16."""
    wdt = jnp.bfloat16 if use_bf16 else jnp.float32
    f32 = jnp.float32
    return {
        "w_in":  p["w_in"].T.astype(wdt),    # (D, 3D)
        "b_in":  p["b_in"].astype(f32),
        "w_out": p["w_out"].T.astype(wdt),   # (D, D)
        "b_out": p["b_out"].astype(f32),
        "ln1_w": p["ln1_w"].astype(f32),
        "ln1_b": p["ln1_b"].astype(f32),
        "w1":    p["w1"].T.astype(wdt),      # (D, DH)
        "b1":    p["b1"].astype(f32),
        "w2":    p["w2"].T.astype(wdt),      # (DH, D)
        "b2":    p["b2"].astype(f32),
        "ln2_w": p["ln2_w"].astype(f32),
        "ln2_b": p["ln2_b"].astype(f32),
    }


def prepare_stacked_params(params, use_bf16):
    """Stack per-layer (pre-transposed) params along a leading L axis."""
    prepared = [prepare_layer_params(p, use_bf16) for p in params]
    return {k: jnp.stack([pp[k] for pp in prepared], axis=0) for k in prepared[0]}


def _vmem_capacity_bytes():
    try:
        return int(pltpu.get_tpu_info().vmem_capacity_bytes)
    except Exception:
        return 64 * 2 ** 20          # conservative: fits v5e/v6e/v7x


def _estimate_vmem_bytes(tb, S, D, DH, ffn_chunk, use_bf16):
    """Rough per-grid-step VMEM footprint: pipelined blocks, per-layer weights
    (double-buffered across the layer axis), scratch and live intermediates."""
    f32 = 4
    wdt = 2 if use_bf16 else 4
    M = tb * S
    chunk = min(ffn_chunk, DH)
    io_blocks = 2 * (2 * M * D * f32) + 2 * (tb * S * f32)            # x + out (dbl-buf) + mask
    weights = 2 * ((3 * D * D + D * D + 2 * D * DH) * wdt + (9 * D + DH) * f32)
    scratch = M * D * f32                                             # ctx buffer
    inter = (M * 3 * D * (f32 + wdt)                                  # qkv + q/k/v casts
             + 2 * tb * S * S * f32                                   # scores + probs (1 head live)
             + 3 * M * D * f32                                        # attn, x1, ff
             + M * chunk * (f32 + wdt))                               # FFN hidden chunk
    return io_blocks + weights + scratch + inter


def _pick_batch_block(B, S, D, DH, ffn_chunk, use_bf16, budget,
                      row_cap=2048, min_rows_for_split=128):
    """Largest divisor of B whose estimated VMEM footprint fits the budget and
    whose row count tb*S stays sane; then, if possible, keep >= 2 batch blocks
    (megacore sharding on multi-TensorCore chips) without dropping the MXU
    M-dimension below ~128 rows."""
    divs = [d for d in range(1, B + 1) if B % d == 0]
    tb = 1
    for d in divs:
        if d * S > max(row_cap, S):
            break
        if _estimate_vmem_bytes(d, S, D, DH, ffn_chunk, use_bf16) <= budget:
            tb = d
    if B // tb < 2:
        for d in reversed(divs):
            if d < tb and B // d >= 2 and d * S >= min_rows_for_split:
                tb = d
                break
    return tb


# ----------------------------------------------------------------------------- wrapper
def transformer_encoder(x, src_key_padding_mask, params, n_heads,
                        batch_block=None, use_bf16=False, ffn_chunk=None):
    """params: list of per-layer dicts in PyTorch nn.Linear layout (all layers
    share shapes, as in nn.TransformerEncoder).  mask: (B, S), truthy == padding.
    use_bf16: run matmuls in bf16 with f32 accumulation (recommended in prod on
    all TPU generations; the demo validates the exact f32 path)."""
    B, S, D = x.shape
    L = len(params)
    DH = params[0]["w1"].shape[0]
    assert D % n_heads == 0

    if ffn_chunk is None:
        ffn_chunk = min(DH, 2048)

    cap = _vmem_capacity_bytes()
    budget = int(0.75 * cap)
    tb = batch_block or _pick_batch_block(B, S, D, DH, ffn_chunk, use_bf16, budget)
    assert B % tb == 0
    G = B // tb
    M = tb * S

    st = prepare_stacked_params(params, use_bf16)

    # Additive key-padding bias, precomputed once, kept in f32 on all paths.
    # TODO(synk): PyTorch yields NaN for a fully-masked key row; here such a row
    # degenerates to a uniform softmax instead.
    pad = src_key_padding_mask.astype(jnp.float32).reshape(B, 1, S)
    neg = jnp.where(pad > 0.5, -1e30, 0.0).astype(jnp.float32)
    x = x.astype(jnp.float32)

    kernel = functools.partial(fused_encoder_kernel, n_heads=n_heads,
                               use_bf16=use_bf16, ffn_chunk=ffn_chunk)

    def wspec(a):
        zeros = (0,) * (a.ndim - 1)
        return pl.BlockSpec((1,) + a.shape[1:], lambda b, l, _z=zeros: (l,) + _z)

    in_specs = [
        pl.BlockSpec((tb, S, D), lambda b, l: (b, 0, 0)),   # x (read once per block)
        pl.BlockSpec((tb, 1, S), lambda b, l: (b, 0, 0)),   # additive padding bias
        wspec(st["w_in"]), wspec(st["b_in"]),
        wspec(st["w_out"]), wspec(st["b_out"]),
        wspec(st["ln1_w"]), wspec(st["ln1_b"]),
        wspec(st["w1"]), wspec(st["b1"]),
        wspec(st["w2"]), wspec(st["b2"]),
        wspec(st["ln2_w"]), wspec(st["ln2_b"]),
    ]
    out_spec = pl.BlockSpec((tb, S, D), lambda b, l: (b, 0, 0))

    weight_keys = ("w_in", "b_in", "w_out", "b_out", "ln1_w", "ln1_b",
                   "w1", "b1", "w2", "b2", "ln2_w", "ln2_b")
    w_layer_bytes = sum(int(st[k].nbytes) for k in weight_keys) // L

    flops_step = (2 * M * D * 3 * D        # QKV projection
                  + 4 * tb * S * S * D     # q@k^T + p@v over all heads
                  + 2 * M * D * D          # output projection
                  + 4 * M * D * DH)        # 2-layer FFN
    cost = pl.CostEstimate(
        flops=int(G * L * flops_step),
        transcendentals=int(G * L * n_heads * tb * S * S),
        bytes_accessed=int(2 * B * S * D * 4 + B * S * 4 + G * L * w_layer_bytes))

    vmem_limit = max(32 << 20, int(0.8 * cap))

    return pl.pallas_call(
        kernel,
        out_shape=jax.ShapeDtypeStruct((B, S, D), jnp.float32),
        grid=(G, L),
        in_specs=in_specs,
        out_specs=out_spec,
        scratch_shapes=[pltpu.VMEM((M, D), jnp.float32)],   # per-head context buffer
        compiler_params=pltpu.CompilerParams(
            dimension_semantics=("parallel", "arbitrary"),  # batch blocks shard over cores
            vmem_limit_bytes=int(vmem_limit)),
        cost_estimate=cost,
    )(x, neg,
      st["w_in"], st["b_in"], st["w_out"], st["b_out"],
      st["ln1_w"], st["ln1_b"],
      st["w1"], st["b1"], st["w2"], st["b2"],
      st["ln2_w"], st["ln2_b"])


# ----------------------------------------------------------------------------- params / reference
def init_layer_params(key, d_model, d_hidden):
    ks = jax.random.split(key, 4)
    s = 0.02
    return {
        "w_in":  s * jax.random.normal(ks[0], (3 * d_model, d_model), jnp.float32),
        "b_in":  jnp.zeros((1, 3 * d_model), jnp.float32),
        "w_out": s * jax.random.normal(ks[1], (d_model, d_model), jnp.float32),
        "b_out": jnp.zeros((1, d_model), jnp.float32),
        "ln1_w": jnp.ones((1, d_model), jnp.float32),
        "ln1_b": jnp.zeros((1, d_model), jnp.float32),
        "w1":    s * jax.random.normal(ks[2], (d_hidden, d_model), jnp.float32),
        "b1":    jnp.zeros((1, d_hidden), jnp.float32),
        "w2":    s * jax.random.normal(ks[3], (d_model, d_hidden), jnp.float32),
        "b2":    jnp.zeros((1, d_model), jnp.float32),
        "ln2_w": jnp.ones((1, d_model), jnp.float32),
        "ln2_b": jnp.zeros((1, d_model), jnp.float32),
    }


def _reference_encoder(x, mask, params, n_heads, eps=1e-5):
    """Pure-JAX reference (mirrors eval-mode nn.TransformerEncoderLayer, post-LN)."""
    B, S, D = x.shape
    H = n_heads
    hd = D // H
    neg = jnp.where(mask.astype(jnp.float32) > 0.5, -1e30, 0.0)[:, None, None, :]

    def ln(z, w, b):
        mu = jnp.mean(z, -1, keepdims=True)
        var = jnp.mean((z - mu) ** 2, -1, keepdims=True)
        return (z - mu) / jnp.sqrt(var + eps) * w + b

    def split(t):
        return t.reshape(B, S, H, hd).transpose(0, 2, 1, 3)

    for p in params:
        qkv = x @ p["w_in"].T + p["b_in"][0]
        q, k, v = qkv[..., :D], qkv[..., D:2 * D], qkv[..., 2 * D:]
        s = jnp.einsum('bhqd,bhkd->bhqk', split(q), split(k)) / math.sqrt(hd) + neg
        att = jax.nn.softmax(s, axis=-1)
        ctx = jnp.einsum('bhqk,bhkd->bhqd', att, split(v))
        ctx = ctx.transpose(0, 2, 1, 3).reshape(B, S, D)
        attn = ctx @ p["w_out"].T + p["b_out"][0]
        x1 = ln(x + attn, p["ln1_w"][0], p["ln1_b"][0])
        ff = jnp.maximum(x1 @ p["w1"].T + p["b1"][0], 0.0) @ p["w2"].T + p["b2"][0]
        x = ln(x1 + ff, p["ln2_w"][0], p["ln2_b"][0])
    return x


# ----------------------------------------------------------------------------- demo
if __name__ == "__main__":
    B, S, D_MODEL, N_HEADS, D_HIDDEN, N_LAYERS = 2, 8, 32, 4, 64, 2

    key = jax.random.PRNGKey(0)
    kx, kp = jax.random.split(key)
    x = jax.random.normal(kx, (B, S, D_MODEL), jnp.float32)

    # last two positions of batch element 1 are padding (True in PyTorch -> 1.0 here)
    mask = jnp.zeros((B, S), jnp.float32).at[1, S - 2:].set(1.0)

    layer_keys = jax.random.split(kp, N_LAYERS)
    params = [init_layer_params(k, D_MODEL, D_HIDDEN) for k in layer_keys]

    ref = _reference_encoder(x, mask, params, N_HEADS)

    # exact f32 path
    out = transformer_encoder(x, mask, params, N_HEADS, use_bf16=False)
    jax.block_until_ready(out)
    assert out.shape == (B, S, D_MODEL)
    err = float(jnp.max(jnp.abs(out - ref)))
    # residual error comes only from the approximate (EUP) softmax reciprocal
    assert err < 2e-2, err

    # bf16 matmul path (f32 accumulation / stats) — sanity check only
    out_bf16 = transformer_encoder(x, mask, params, N_HEADS, use_bf16=True)
    jax.block_until_ready(out_bf16)
    assert bool(jnp.all(jnp.isfinite(out_bf16)))
    err_bf16 = float(jnp.max(jnp.abs(out_bf16 - ref)))
    assert err_bf16 < 0.3, err_bf16

    print("KERNEL_OK")
</pallas_src>

<mosaic_0001>
module attributes {stable_mosaic.version = 11 : i64} {
  func.func @fused_encoder_kernel(%arg0: i32, %arg1: i32, %arg2: memref<2x8x32xf32, #tpu.memory_space<vmem>>, %arg3: memref<2x1x8xf32, #tpu.memory_space<vmem>>, %arg4: memref<1x32x96xf32, #tpu.memory_space<vmem>>, %arg5: memref<1x1x96xf32, #tpu.memory_space<vmem>>, %arg6: memref<1x32x32xf32, #tpu.memory_space<vmem>>, %arg7: memref<1x1x32xf32, #tpu.memory_space<vmem>>, %arg8: memref<1x1x32xf32, #tpu.memory_space<vmem>>, %arg9: memref<1x1x32xf32, #tpu.memory_space<vmem>>, %arg10: memref<1x32x64xf32, #tpu.memory_space<vmem>>, %arg11: memref<1x1x64xf32, #tpu.memory_space<vmem>>, %arg12: memref<1x64x32xf32, #tpu.memory_space<vmem>>, %arg13: memref<1x1x32xf32, #tpu.memory_space<vmem>>, %arg14: memref<1x1x32xf32, #tpu.memory_space<vmem>>, %arg15: memref<1x1x32xf32, #tpu.memory_space<vmem>>, %arg16: memref<2x8x32xf32, #tpu.memory_space<vmem>>, %arg17: memref<16x32xf32, #tpu.memory_space<vmem>>) attributes {dimension_semantics = [#tpu.dimension_semantics<parallel>, #tpu.dimension_semantics<arbitrary>], iteration_bounds = array<i64: 1, 2>, scalar_prefetch = 0 : i64, scratch_operands = 1 : i64, tpu.core_type = #tpu.core_type<tc>, window_params = [{transform_indices = @transform_0, window_bounds = array<i64: 2, 8, 32>}, {transform_indices = @transform_1, window_bounds = array<i64: 2, 1, 8>}, {transform_indices = @transform_2, window_bounds = array<i64: 1, 32, 96>}, {transform_indices = @transform_3, window_bounds = array<i64: 1, 1, 96>}, {transform_indices = @transform_4, window_bounds = array<i64: 1, 32, 32>}, {transform_indices = @transform_5, window_bounds = array<i64: 1, 1, 32>}, {transform_indices = @transform_6, window_bounds = array<i64: 1, 1, 32>}, {transform_indices = @transform_7, window_bounds = array<i64: 1, 1, 32>}, {transform_indices = @transform_8, window_bounds = array<i64: 1, 32, 64>}, {transform_indices = @transform_9, window_bounds = array<i64: 1, 1, 64>}, {transform_indices = @transform_10, window_bounds = array<i64: 1, 64, 32>}, {transform_indices = @transform_11, window_bounds = array<i64: 1, 1, 32>}, {transform_indices = @transform_12, window_bounds = array<i64: 1, 1, 32>}, {transform_indices = @transform_13, window_bounds = array<i64: 1, 1, 32>}, {transform_indices = @transform_14, window_bounds = array<i64: 2, 8, 32>}]} {
    %c0_i32 = arith.constant 0 : i32
    %0 = arith.cmpi eq, %arg1, %c0_i32 : i32
    %1 = arith.extui %0 : i1 to i32
    %c0_i32_0 = arith.constant 0 : i32
    %2 = arith.cmpi ne, %1, %c0_i32_0 : i32
    scf.if %2 {
      %c0_84 = arith.constant 0 : index
      %c0_85 = arith.constant 0 : index
      %c0_86 = arith.constant 0 : index
      %192 = vector.load %arg2[%c0_84, %c0_85, %c0_86] : memref<2x8x32xf32, #tpu.memory_space<vmem>>, vector<2x8x32xf32>
      %c0_87 = arith.constant 0 : index
      %c0_88 = arith.constant 0 : index
      %c0_89 = arith.constant 0 : index
      %193 = vector.load %arg16[%c0_87, %c0_88, %c0_89] : memref<2x8x32xf32, #tpu.memory_space<vmem>>, vector<2x8x32xf32>
      tpu.vector_store %arg16[%c0_87, %c0_88, %c0_89], %192 {strides = array<i32>} : memref<2x8x32xf32, #tpu.memory_space<vmem>>, vector<2x8x32xf32>,
    } else {
    }
    %c0 = arith.constant 0 : index
    %c0_1 = arith.constant 0 : index
    %c0_2 = arith.constant 0 : index
    %3 = vector.load %arg16[%c0, %c0_1, %c0_2] : memref<2x8x32xf32, #tpu.memory_space<vmem>>, vector<2x8x32xf32>
    %c0_3 = arith.constant 0 : index
    %c0_4 = arith.constant 0 : index
    %c0_5 = arith.constant 0 : index
    %4 = vector.load %arg3[%c0_3, %c0_4, %c0_5] : memref<2x1x8xf32, #tpu.memory_space<vmem>>, vector<2x1x8xf32>
    %5 = vector.shape_cast %3 : vector<2x8x32xf32> to vector<16x32xf32>
    %c0_6 = arith.constant 0 : index
    %c0_7 = arith.constant 0 : index
    %c0_8 = arith.constant 0 : index
    %6 = vector.load %arg4[%c0_6, %c0_7, %c0_8] : memref<1x32x96xf32, #tpu.memory_space<vmem>>, vector<1x32x96xf32>
    %7 = vector.shape_cast %6 : vector<1x32x96xf32> to vector<32x96xf32>
    %cst = arith.constant dense<0.000000e+00> : vector<16x96xf32>
    %8 = tpu.matmul %5, %7, %cst {dimension_numbers = #tpu.dot_dimension_numbers<[1], [0], [0], [1], [0, 0, 1, 1], [], []>} : vector<16x32xf32>, vector<32x96xf32>, vector<16x96xf32> -> vector<16x96xf32>
    %c0_9 = arith.constant 0 : index
    %c0_10 = arith.constant 0 : index
    %c0_11 = arith.constant 0 : index
    %9 = vector.load %arg5[%c0_9, %c0_10, %c0_11] : memref<1x1x96xf32, #tpu.memory_space<vmem>>, vector<1x1x96xf32>
    %10 = vector.shape_cast %9 : vector<1x1x96xf32> to vector<96xf32>
    %11 = vector.shape_cast %10 : vector<96xf32> to vector<1x96xf32>
    %12 = vector.broadcast %11 : vector<1x96xf32> to vector<16x96xf32>
    %13 = arith.addf %8, %12 : vector<16x96xf32>
    %14 = vector.extract_strided_slice %13 {offsets = [0, 0], sizes = [16, 32], strides = [1, 1]} : vector<16x96xf32> to vector<16x32xf32>
    %cst_12 = arith.constant 0.353553385 : f32
    %15 = vector.broadcast %cst_12 : f32 to vector<16x32xf32>
    %16 = arith.mulf %14, %15 : vector<16x32xf32>
    %17 = vector.extract_strided_slice %13 {offsets = [0, 32], sizes = [16, 32], strides = [1, 1]} : vector<16x96xf32> to vector<16x32xf32>
    %18 = vector.extract_strided_slice %13 {offsets = [0, 64], sizes = [16, 32], strides = [1, 1]} : vector<16x96xf32> to vector<16x32xf32>
    %19 = vector.extract_strided_slice %16 {offsets = [0, 0], sizes = [16, 8], strides = [1, 1]} : vector<16x32xf32> to vector<16x8xf32>
    %20 = vector.shape_cast %19 : vector<16x8xf32> to vector<2x8x8xf32>
    %21 = vector.extract_strided_slice %17 {offsets = [0, 0], sizes = [16, 8], strides = [1, 1]} : vector<16x32xf32> to vector<16x8xf32>
    %22 = vector.shape_cast %21 : vector<16x8xf32> to vector<2x8x8xf32>
    %23 = vector.extract_strided_slice %18 {offsets = [0, 0], sizes = [16, 8], strides = [1, 1]} : vector<16x32xf32> to vector<16x8xf32>
    %24 = vector.shape_cast %23 : vector<16x8xf32> to vector<2x8x8xf32>
    "tpu.trace_start"() <{level = 10 : i32, message = "bqd,bkd->bqk"}> : () -> ()
    %cst_13 = arith.constant dense<0.000000e+00> : vector<2x8x8xf32>
    %25 = tpu.matmul %20, %22, %cst_13 {dimension_numbers = #tpu.dot_dimension_numbers<[2], [2], [1], [1], [0, 0, 0, 1, 1, 1], [0], [0]>} : vector<2x8x8xf32>, vector<2x8x8xf32>, vector<2x8x8xf32> -> vector<2x8x8xf32>
    "tpu.trace_stop"() : () -> ()
    %26 = vector.broadcast %4 : vector<2x1x8xf32> to vector<2x8x8xf32>
    %27 = arith.addf %25, %26 : vector<2x8x8xf32>
    %cst_14 = arith.constant dense<0xFF800000> : vector<2x8xf32>
    %28 = vector.multi_reduction <maximumf>, %27, %cst_14 [2] : vector<2x8x8xf32> to vector<2x8xf32>
    %29 = vector.shape_cast %28 : vector<2x8xf32> to vector<2x8x1xf32>
    %30 = vector.broadcast %29 : vector<2x8x1xf32> to vector<2x8x8xf32>
    %31 = arith.subf %27, %30 : vector<2x8x8xf32>
    %32 = math.exp %31 : vector<2x8x8xf32>
    %cst_15 = arith.constant dense<0.000000e+00> : vector<2x8xf32>
    %33 = vector.multi_reduction <add>, %32, %cst_15 [2] : vector<2x8x8xf32> to vector<2x8xf32>
    %34 = vector.shape_cast %33 : vector<2x8xf32> to vector<2x8x1xf32>
    %35 = tpu.reciprocal %34 {approx = true} : vector<2x8x1xf32> -> vector<2x8x1xf32>
    %36 = vector.broadcast %35 : vector<2x8x1xf32> to vector<2x8x8xf32>
    %37 = arith.mulf %32, %36 : vector<2x8x8xf32>
    "tpu.trace_start"() <{level = 10 : i32, message = "bqk,bkd->bqd"}> : () -> ()
    %cst_16 = arith.constant dense<0.000000e+00> : vector<2x8x8xf32>
    %38 = tpu.matmul %37, %24, %cst_16 {dimension_numbers = #tpu.dot_dimension_numbers<[2], [1], [1], [2], [0, 0, 0, 1, 1, 2], [0], [0]>} : vector<2x8x8xf32>, vector<2x8x8xf32>, vector<2x8x8xf32> -> vector<2x8x8xf32>
    "tpu.trace_stop"() : () -> ()
    %39 = vector.shape_cast %38 : vector<2x8x8xf32> to vector<16x8xf32>
    %c0_17 = arith.constant 0 : index
    %c0_18 = arith.constant 0 : index
    %40 = vector.load %arg17[%c0_17, %c0_18] : memref<16x32xf32, #tpu.memory_space<vmem>>, vector<16x8xf32>
    tpu.vector_store %arg17[%c0_17, %c0_18], %39 {strides = array<i32>} : memref<16x32xf32, #tpu.memory_space<vmem>>, vector<16x8xf32>,
    %41 = vector.extract_strided_slice %16 {offsets = [0, 8], sizes = [16, 8], strides = [1, 1]} : vector<16x32xf32> to vector<16x8xf32>
    %42 = vector.shape_cast %41 : vector<16x8xf32> to vector<2x8x8xf32>
    %43 = vector.extract_strided_slice %17 {offsets = [0, 8], sizes = [16, 8], strides = [1, 1]} : vector<16x32xf32> to vector<16x8xf32>
    %44 = vector.shape_cast %43 : vector<16x8xf32> to vector<2x8x8xf32>
    %45 = vector.extract_strided_slice %18 {offsets = [0, 8], sizes = [16, 8], strides = [1, 1]} : vector<16x32xf32> to vector<16x8xf32>
    %46 = vector.shape_cast %45 : vector<16x8xf32> to vector<2x8x8xf32>
    "tpu.trace_start"() <{level = 10 : i32, message = "bqd,bkd->bqk"}> : () -> ()
    %cst_19 = arith.constant dense<0.000000e+00> : vector<2x8x8xf32>
    %47 = tpu.matmul %42, %44, %cst_19 {dimension_numbers = #tpu.dot_dimension_numbers<[2], [2], [1], [1], [0, 0, 0, 1, 1, 1], [0], [0]>} : vector<2x8x8xf32>, vector<2x8x8xf32>, vector<2x8x8xf32> -> vector<2x8x8xf32>
    "tpu.trace_stop"() : () -> ()
    %48 = vector.broadcast %4 : vector<2x1x8xf32> to vector<2x8x8xf32>
    %49 = arith.addf %47, %48 : vector<2x8x8xf32>
    %cst_20 = arith.constant dense<0xFF800000> : vector<2x8xf32>
    %50 = vector.multi_reduction <maximumf>, %49, %cst_20 [2] : vector<2x8x8xf32> to vector<2x8xf32>
    %51 = vector.shape_cast %50 : vector<2x8xf32> to vector<2x8x1xf32>
    %52 = vector.broadcast %51 : vector<2x8x1xf32> to vector<2x8x8xf32>
    %53 = arith.subf %49, %52 : vector<2x8x8xf32>
    %54 = math.exp %53 : vector<2x8x8xf32>
    %cst_21 = arith.constant dense<0.000000e+00> : vector<2x8xf32>
    %55 = vector.multi_reduction <add>, %54, %cst_21 [2] : vector<2x8x8xf32> to vector<2x8xf32>
    %56 = vector.shape_cast %55 : vector<2x8xf32> to vector<2x8x1xf32>
    %57 = tpu.reciprocal %56 {approx = true} : vector<2x8x1xf32> -> vector<2x8x1xf32>
    %58 = vector.broadcast %57 : vector<2x8x1xf32> to vector<2x8x8xf32>
    %59 = arith.mulf %54, %58 : vector<2x8x8xf32>
    "tpu.trace_start"() <{level = 10 : i32, message = "bqk,bkd->bqd"}> : () -> ()
    %cst_22 = arith.constant dense<0.000000e+00> : vector<2x8x8xf32>
    %60 = tpu.matmul %59, %46, %cst_22 {dimension_numbers = #tpu.dot_dimension_numbers<[2], [1], [1], [2], [0, 0, 0, 1, 1, 2], [0], [0]>} : vector<2x8x8xf32>, vector<2x8x8xf32>, vector<2x8x8xf32> -> vector<2x8x8xf32>
    "tpu.trace_stop"() : () -> ()
    %61 = vector.shape_cast %60 : vector<2x8x8xf32> to vector<16x8xf32>
    %c0_23 = arith.constant 0 : index
    %c8 = arith.constant 8 : index
    %62 = vector.load %arg17[%c0_23, %c8] : memref<16x32xf32, #tpu.memory_space<vmem>>, vector<16x8xf32>
    tpu.vector_store %arg17[%c0_23, %c8], %61 {strides = array<i32>} : memref<16x32xf32, #tpu.memory_space<vmem>>, vector<16x8xf32>,
    %63 = vector.extract_strided_slice %16 {offsets = [0, 16], sizes = [16, 8], strides = [1, 1]} : vector<16x32xf32> to vector<16x8xf32>
    %64 = vector.shape_cast %63 : vector<16x8xf32> to vector<2x8x8xf32>
    %65 = vector.extract_strided_slice %17 {offsets = [0, 16], sizes = [16, 8], strides = [1, 1]} : vector<16x32xf32> to vector<16x8xf32>
    %66 = vector.shape_cast %65 : vector<16x8xf32> to vector<2x8x8xf32>
    %67 = vector.extract_strided_slice %18 {offsets = [0, 16], sizes = [16, 8], strides = [1, 1]} : vector<16x32xf32> to vector<16x8xf32>
    %68 = vector.shape_cast %67 : vector<16x8xf32> to vector<2x8x8xf32>
    "tpu.trace_start"() <{level = 10 : i32, message = "bqd,bkd->bqk"}> : () -> ()
    %cst_24 = arith.constant dense<0.000000e+00> : vector<2x8x8xf32>
    %69 = tpu.matmul %64, %66, %cst_24 {dimension_numbers = #tpu.dot_dimension_numbers<[2], [2], [1], [1], [0, 0, 0, 1, 1, 1], [0], [0]>} : vector<2x8x8xf32>, vector<2x8x8xf32>, vector<2x8x8xf32> -> vector<2x8x8xf32>
    "tpu.trace_stop"() : () -> ()
    %70 = vector.broadcast %4 : vector<2x1x8xf32> to vector<2x8x8xf32>
    %71 = arith.addf %69, %70 : vector<2x8x8xf32>
    %cst_25 = arith.constant dense<0xFF800000> : vector<2x8xf32>
    %72 = vector.multi_reduction <maximumf>, %71, %cst_25 [2] : vector<2x8x8xf32> to vector<2x8xf32>
    %73 = vector.shape_cast %72 : vector<2x8xf32> to vector<2x8x1xf32>
    %74 = vector.broadcast %73 : vector<2x8x1xf32> to vector<2x8x8xf32>
    %75 = arith.subf %71, %74 : vector<2x8x8xf32>
    %76 = math.exp %75 : vector<2x8x8xf32>
    %cst_26 = arith.constant dense<0.000000e+00> : vector<2x8xf32>
    %77 = vector.multi_reduction <add>, %76, %cst_26 [2] : vector<2x8x8xf32> to vector<2x8xf32>
    %78 = vector.shape_cast %77 : vector<2x8xf32> to vector<2x8x1xf32>
    %79 = tpu.reciprocal %78 {approx = true} : vector<2x8x1xf32> -> vector<2x8x1xf32>
    %80 = vector.broadcast %79 : vector<2x8x1xf32> to vector<2x8x8xf32>
    %81 = arith.mulf %76, %80 : vector<2x8x8xf32>
    "tpu.trace_start"() <{level = 10 : i32, message = "bqk,bkd->bqd"}> : () -> ()
    %cst_27 = arith.constant dense<0.000000e+00> : vector<2x8x8xf32>
    %82 = tpu.matmul %81, %68, %cst_27 {dimension_numbers = #tpu.dot_dimension_numbers<[2], [1], [1], [2], [0, 0, 0, 1, 1, 2], [0], [0]>} : vector<2x8x8xf32>, vector<2x8x8xf32>, vector<2x8x8xf32> -> vector<2x8x8xf32>
    "tpu.trace_stop"() : () -> ()
    %83 = vector.shape_cast %82 : vector<2x8x8xf32> to vector<16x8xf32>
    %c0_28 = arith.constant 0 : index
    %c16 = arith.constant 16 : index
    %84 = vector.load %arg17[%c0_28, %c16] : memref<16x32xf32, #tpu.memory_space<vmem>>, vector<16x8xf32>
    tpu.vector_store %arg17[%c0_28, %c16], %83 {strides = array<i32>} : memref<16x32xf32, #tpu.memory_space<vmem>>, vector<16x8xf32>,
    %85 = vector.extract_strided_slice %16 {offsets = [0, 24], sizes = [16, 8], strides = [1, 1]} : vector<16x32xf32> to vector<16x8xf32>
    %86 = vector.shape_cast %85 : vector<16x8xf32> to vector<2x8x8xf32>
    %87 = vector.extract_strided_slice %17 {offsets = [0, 24], sizes = [16, 8], strides = [1, 1]} : vector<16x32xf32> to vector<16x8xf32>
    %88 = vector.shape_cast %87 : vector<16x8xf32> to vector<2x8x8xf32>
    %89 = vector.extract_strided_slice %18 {offsets = [0, 24], sizes = [16, 8], strides = [1, 1]} : vector<16x32xf32> to vector<16x8xf32>
    %90 = vector.shape_cast %89 : vector<16x8xf32> to vector<2x8x8xf32>
    "tpu.trace_start"() <{level = 10 : i32, message = "bqd,bkd->bqk"}> : () -> ()
    %cst_29 = arith.constant dense<0.000000e+00> : vector<2x8x8xf32>
    %91 = tpu.matmul %86, %88, %cst_29 {dimension_numbers = #tpu.dot_dimension_numbers<[2], [2], [1], [1], [0, 0, 0, 1, 1, 1], [0], [0]>} : vector<2x8x8xf32>, vector<2x8x8xf32>, vector<2x8x8xf32> -> vector<2x8x8xf32>
    "tpu.trace_stop"() : () -> ()
    %92 = vector.broadcast %4 : vector<2x1x8xf32> to vector<2x8x8xf32>
    %93 = arith.addf %91, %92 : vector<2x8x8xf32>
    %cst_30 = arith.constant dense<0xFF800000> : vector<2x8xf32>
    %94 = vector.multi_reduction <maximumf>, %93, %cst_30 [2] : vector<2x8x8xf32> to vector<2x8xf32>
    %95 = vector.shape_cast %94 : vector<2x8xf32> to vector<2x8x1xf32>
    %96 = vector.broadcast %95 : vector<2x8x1xf32> to vector<2x8x8xf32>
    %97 = arith.subf %93, %96 : vector<2x8x8xf32>
    %98 = math.exp %97 : vector<2x8x8xf32>
    %cst_31 = arith.constant dense<0.000000e+00> : vector<2x8xf32>
    %99 = vector.multi_reduction <add>, %98, %cst_31 [2] : vector<2x8x8xf32> to vector<2x8xf32>
    %100 = vector.shape_cast %99 : vector<2x8xf32> to vector<2x8x1xf32>
    %101 = tpu.reciprocal %100 {approx = true} : vector<2x8x1xf32> -> vector<2x8x1xf32>
    %102 = vector.broadcast %101 : vector<2x8x1xf32> to vector<2x8x8xf32>
    %103 = arith.mulf %98, %102 : vector<2x8x8xf32>
    "tpu.trace_start"() <{level = 10 : i32, message = "bqk,bkd->bqd"}> : () -> ()
    %cst_32 = arith.constant dense<0.000000e+00> : vector<2x8x8xf32>
    %104 = tpu.matmul %103, %90, %cst_32 {dimension_numbers = #tpu.dot_dimension_numbers<[2], [1], [1], [2], [0, 0, 0, 1, 1, 2], [0], [0]>} : vector<2x8x8xf32>, vector<2x8x8xf32>, vector<2x8x8xf32> -> vector<2x8x8xf32>
    "tpu.trace_stop"() : () -> ()
    %105 = vector.shape_cast %104 : vector<2x8x8xf32> to vector<16x8xf32>
    %c0_33 = arith.constant 0 : index
    %c24 = arith.constant 24 : index
    %106 = vector.load %arg17[%c0_33, %c24] : memref<16x32xf32, #tpu.memory_space<vmem>>, vector<16x8xf32>
    tpu.vector_store %arg17[%c0_33, %c24], %105 {strides = array<i32>} : memref<16x32xf32, #tpu.memory_space<vmem>>, vector<16x8xf32>,
    %c0_34 = arith.constant 0 : index
    %c0_35 = arith.constant 0 : index
    %107 = vector.load %arg17[%c0_34, %c0_35] : memref<16x32xf32, #tpu.memory_space<vmem>>, vector<16x32xf32>
    %c0_36 = arith.constant 0 : index
    %c0_37 = arith.constant 0 : index
    %c0_38 = arith.constant 0 : index
    %108 = vector.load %arg6[%c0_36, %c0_37, %c0_38] : memref<1x32x32xf32, #tpu.memory_space<vmem>>, vector<1x32x32xf32>
    %109 = vector.shape_cast %108 : vector<1x32x32xf32> to vector<32x32xf32>
    %cst_39 = arith.constant dense<0.000000e+00> : vector<16x32xf32>
    %110 = tpu.matmul %107, %109, %cst_39 {dimension_numbers = #tpu.dot_dimension_numbers<[1], [0], [0], [1], [0, 0, 1, 1], [], []>} : vector<16x32xf32>, vector<32x32xf32>, vector<16x32xf32> -> vector<16x32xf32>
    %c0_40 = arith.constant 0 : index
    %c0_41 = arith.constant 0 : index
    %c0_42 = arith.constant 0 : index
    %111 = vector.load %arg7[%c0_40, %c0_41, %c0_42] : memref<1x1x32xf32, #tpu.memory_space<vmem>>, vector<1x1x32xf32>
    %112 = vector.shape_cast %111 : vector<1x1x32xf32> to vector<32xf32>
    %113 = vector.shape_cast %112 : vector<32xf32> to vector<1x32xf32>
    %114 = vector.broadcast %113 : vector<1x32xf32> to vector<16x32xf32>
    %115 = arith.addf %110, %114 : vector<16x32xf32>
    %116 = arith.addf %5, %115 : vector<16x32xf32>
    %c0_43 = arith.constant 0 : index
    %c0_44 = arith.constant 0 : index
    %c0_45 = arith.constant 0 : index
    %117 = vector.load %arg8[%c0_43, %c0_44, %c0_45] : memref<1x1x32xf32, #tpu.memory_space<vmem>>, vector<1x1x32xf32>
    %118 = vector.shape_cast %117 : vector<1x1x32xf32> to vector<32xf32>
    %c0_46 = arith.constant 0 : index
    %c0_47 = arith.constant 0 : index
    %c0_48 = arith.constant 0 : index
    %119 = vector.load %arg9[%c0_46, %c0_47, %c0_48] : memref<1x1x32xf32, #tpu.memory_space<vmem>>, vector<1x1x32xf32>
    %120 = vector.shape_cast %119 : vector<1x1x32xf32> to vector<32xf32>
    %cst_49 = arith.constant dense<0.000000e+00> : vector<16xf32>
    %121 = vector.multi_reduction <add>, %116, %cst_49 [1] : vector<16x32xf32> to vector<16xf32>
    %122 = vector.shape_cast %121 : vector<16xf32> to vector<16x1xf32>
    %cst_50 = arith.constant 3.200000e+01 : f32
    %123 = vector.broadcast %cst_50 : f32 to vector<16x1xf32>
    %124 = arith.divf %122, %123 : vector<16x1xf32>
    %125 = vector.broadcast %124 : vector<16x1xf32> to vector<16x32xf32>
    %126 = arith.subf %116, %125 : vector<16x32xf32>
    %127 = arith.mulf %126, %126 : vector<16x32xf32>
    %cst_51 = arith.constant dense<0.000000e+00> : vector<16xf32>
    %128 = vector.multi_reduction <add>, %127, %cst_51 [1] : vector<16x32xf32> to vector<16xf32>
    %129 = vector.shape_cast %128 : vector<16xf32> to vector<16x1xf32>
    %cst_52 = arith.constant 3.200000e+01 : f32
    %130 = vector.broadcast %cst_52 : f32 to vector<16x1xf32>
    %131 = arith.divf %129, %130 : vector<16x1xf32>
    %cst_53 = arith.constant 9.99999974E-6 : f32
    %132 = vector.broadcast %cst_53 : f32 to vector<16x1xf32>
    %133 = arith.addf %131, %132 : vector<16x1xf32>
    %134 = math.rsqrt %133 : vector<16x1xf32>
    %135 = vector.broadcast %134 : vector<16x1xf32> to vector<16x32xf32>
    %136 = arith.mulf %126, %135 : vector<16x32xf32>
    %137 = vector.shape_cast %118 : vector<32xf32> to vector<1x32xf32>
    %138 = vector.broadcast %137 : vector<1x32xf32> to vector<16x32xf32>
    %139 = arith.mulf %136, %138 : vector<16x32xf32>
    %140 = vector.shape_cast %120 : vector<32xf32> to vector<1x32xf32>
    %141 = vector.broadcast %140 : vector<1x32xf32> to vector<16x32xf32>
    %142 = arith.addf %139, %141 : vector<16x32xf32>
    %cst_54 = arith.constant 0.000000e+00 : f32
    %143 = vector.broadcast %cst_54 : f32 to vector<16x32xf32>
    %c0_55 = arith.constant 0 : index
    %c0_56 = arith.constant 0 : index
    %c0_57 = arith.constant 0 : index
    %144 = vector.load %arg10[%c0_55, %c0_56, %c0_57] : memref<1x32x64xf32, #tpu.memory_space<vmem>>, vector<1x32x64xf32>
    %145 = vector.shape_cast %144 : vector<1x32x64xf32> to vector<32x64xf32>
    %cst_58 = arith.constant dense<0.000000e+00> : vector<16x64xf32>
    %146 = tpu.matmul %142, %145, %cst_58 {dimension_numbers = #tpu.dot_dimension_numbers<[1], [0], [0], [1], [0, 0, 1, 1], [], []>} : vector<16x32xf32>, vector<32x64xf32>, vector<16x64xf32> -> vector<16x64xf32>
    %c0_59 = arith.constant 0 : index
    %c0_60 = arith.constant 0 : index
    %c0_61 = arith.constant 0 : index
    %147 = vector.load %arg11[%c0_59, %c0_60, %c0_61] : memref<1x1x64xf32, #tpu.memory_space<vmem>>, vector<1x1x64xf32>
    %148 = vector.shape_cast %147 : vector<1x1x64xf32> to vector<64xf32>
    %149 = vector.shape_cast %148 : vector<64xf32> to vector<1x64xf32>
    %150 = vector.broadcast %149 : vector<1x64xf32> to vector<16x64xf32>
    %151 = arith.addf %146, %150 : vector<16x64xf32>
    %cst_62 = arith.constant 0.000000e+00 : f32
    %152 = vector.broadcast %cst_62 : f32 to vector<16x64xf32>
    %153 = arith.maximumf %151, %152 : vector<16x64xf32>
    %c0_63 = arith.constant 0 : index
    %c0_64 = arith.constant 0 : index
    %c0_65 = arith.constant 0 : index
    %154 = vector.load %arg12[%c0_63, %c0_64, %c0_65] : memref<1x64x32xf32, #tpu.memory_space<vmem>>, vector<1x64x32xf32>
    %155 = vector.shape_cast %154 : vector<1x64x32xf32> to vector<64x32xf32>
    %cst_66 = arith.constant dense<0.000000e+00> : vector<16x32xf32>
    %156 = tpu.matmul %153, %155, %cst_66 {dimension_numbers = #tpu.dot_dimension_numbers<[1], [0], [0], [1], [0, 0, 1, 1], [], []>} : vector<16x64xf32>, vector<64x32xf32>, vector<16x32xf32> -> vector<16x32xf32>
    %157 = arith.addf %143, %156 : vector<16x32xf32>
    %c0_67 = arith.constant 0 : index
    %c0_68 = arith.constant 0 : index
    %c0_69 = arith.constant 0 : index
    %158 = vector.load %arg13[%c0_67, %c0_68, %c0_69] : memref<1x1x32xf32, #tpu.memory_space<vmem>>, vector<1x1x32xf32>
    %159 = vector.shape_cast %158 : vector<1x1x32xf32> to vector<32xf32>
    %160 = vector.shape_cast %159 : vector<32xf32> to vector<1x32xf32>
    %161 = vector.broadcast %160 : vector<1x32xf32> to vector<16x32xf32>
    %162 = arith.addf %157, %161 : vector<16x32xf32>
    %163 = arith.addf %142, %162 : vector<16x32xf32>
    %c0_70 = arith.constant 0 : index
    %c0_71 = arith.constant 0 : index
    %c0_72 = arith.constant 0 : index
    %164 = vector.load %arg14[%c0_70, %c0_71, %c0_72] : memref<1x1x32xf32, #tpu.memory_space<vmem>>, vector<1x1x32xf32>
    %165 = vector.shape_cast %164 : vector<1x1x32xf32> to vector<32xf32>
    %c0_73 = arith.constant 0 : index
    %c0_74 = arith.constant 0 : index
    %c0_75 = arith.constant 0 : index
    %166 = vector.load %arg15[%c0_73, %c0_74, %c0_75] : memref<1x1x32xf32, #tpu.memory_space<vmem>>, vector<1x1x32xf32>
    %167 = vector.shape_cast %166 : vector<1x1x32xf32> to vector<32xf32>
    %cst_76 = arith.constant dense<0.000000e+00> : vector<16xf32>
    %168 = vector.multi_reduction <add>, %163, %cst_76 [1] : vector<16x32xf32> to vector<16xf32>
    %169 = vector.shape_cast %168 : vector<16xf32> to vector<16x1xf32>
    %cst_77 = arith.constant 3.200000e+01 : f32
    %170 = vector.broadcast %cst_77 : f32 to vector<16x1xf32>
    %171 = arith.divf %169, %170 : vector<16x1xf32>
    %172 = vector.broadcast %171 : vector<16x1xf32> to vector<16x32xf32>
    %173 = arith.subf %163, %172 : vector<16x32xf32>
    %174 = arith.mulf %173, %173 : vector<16x32xf32>
    %cst_78 = arith.constant dense<0.000000e+00> : vector<16xf32>
    %175 = vector.multi_reduction <add>, %174, %cst_78 [1] : vector<16x32xf32> to vector<16xf32>
    %176 = vector.shape_cast %175 : vector<16xf32> to vector<16x1xf32>
    %cst_79 = arith.constant 3.200000e+01 : f32
    %177 = vector.broadcast %cst_79 : f32 to vector<16x1xf32>
    %178 = arith.divf %176, %177 : vector<16x1xf32>
    %cst_80 = arith.constant 9.99999974E-6 : f32
    %179 = vector.broadcast %cst_80 : f32 to vector<16x1xf32>
    %180 = arith.addf %178, %179 : vector<16x1xf32>
    %181 = math.rsqrt %180 : vector<16x1xf32>
    %182 = vector.broadcast %181 : vector<16x1xf32> to vector<16x32xf32>
    %183 = arith.mulf %173, %182 : vector<16x32xf32>
    %184 = vector.shape_cast %165 : vector<32xf32> to vector<1x32xf32>
    %185 = vector.broadcast %184 : vector<1x32xf32> to vector<16x32xf32>
    %186 = arith.mulf %183, %185 : vector<16x32xf32>
    %187 = vector.shape_cast %167 : vector<32xf32> to vector<1x32xf32>
    %188 = vector.broadcast %187 : vector<1x32xf32> to vector<16x32xf32>
    %189 = arith.addf %186, %188 : vector<16x32xf32>
    %190 = vector.shape_cast %189 : vector<16x32xf32> to vector<2x8x32xf32>
    %c0_81 = arith.constant 0 : index
    %c0_82 = arith.constant 0 : index
    %c0_83 = arith.constant 0 : index
    %191 = vector.load %arg16[%c0_81, %c0_82, %c0_83] : memref<2x8x32xf32, #tpu.memory_space<vmem>>, vector<2x8x32xf32>
    tpu.vector_store %arg16[%c0_81, %c0_82, %c0_83], %190 {strides = array<i32>} : memref<2x8x32xf32, #tpu.memory_space<vmem>>, vector<2x8x32xf32>,
    return
  }
  func.func @transform_0(%arg0: i32, %arg1: i32) -> (i32, i32, i32) {
    %c0_i32 = arith.constant 0 : i32
    %c0_i32_0 = arith.constant 0 : i32
    %c0_i32_1 = arith.constant 0 : i32
    return %arg0, %c0_i32, %c0_i32_0 : i32, i32, i32
  }
  func.func @transform_1(%arg0: i32, %arg1: i32) -> (i32, i32, i32) {
    %c0_i32 = arith.constant 0 : i32
    %c0_i32_0 = arith.constant 0 : i32
    %c0_i32_1 = arith.constant 0 : i32
    return %arg0, %c0_i32, %c0_i32_0 : i32, i32, i32
  }
  func.func @transform_2(%arg0: i32, %arg1: i32) -> (i32, i32, i32) {
    %c0_i32 = arith.constant 0 : i32
    %c0_i32_0 = arith.constant 0 : i32
    %c0_i32_1 = arith.constant 0 : i32
    return %arg1, %c0_i32, %c0_i32_0 : i32, i32, i32
  }
  func.func @transform_3(%arg0: i32, %arg1: i32) -> (i32, i32, i32) {
    %c0_i32 = arith.constant 0 : i32
    %c0_i32_0 = arith.constant 0 : i32
    %c0_i32_1 = arith.constant 0 : i32
    return %arg1, %c0_i32, %c0_i32_0 : i32, i32, i32
  }
  func.func @transform_4(%arg0: i32, %arg1: i32) -> (i32, i32, i32) {
    %c0_i32 = arith.constant 0 : i32
    %c0_i32_0 = arith.constant 0 : i32
    %c0_i32_1 = arith.constant 0 : i32
    return %arg1, %c0_i32, %c0_i32_0 : i32, i32, i32
  }
  func.func @transform_5(%arg0: i32, %arg1: i32) -> (i32, i32, i32) {
    %c0_i32 = arith.constant 0 : i32
    %c0_i32_0 = arith.constant 0 : i32
    %c0_i32_1 = arith.constant 0 : i32
    return %arg1, %c0_i32, %c0_i32_0 : i32, i32, i32
  }
  func.func @transform_6(%arg0: i32, %arg1: i32) -> (i32, i32, i32) {
    %c0_i32 = arith.constant 0 : i32
    %c0_i32_0 = arith.constant 0 : i32
    %c0_i32_1 = arith.constant 0 : i32
    return %arg1, %c0_i32, %c0_i32_0 : i32, i32, i32
  }
  func.func @transform_7(%arg0: i32, %arg1: i32) -> (i32, i32, i32) {
    %c0_i32 = arith.constant 0 : i32
    %c0_i32_0 = arith.constant 0 : i32
    %c0_i32_1 = arith.constant 0 : i32
    return %arg1, %c0_i32, %c0_i32_0 : i32, i32, i32
  }
  func.func @transform_8(%arg0: i32, %arg1: i32) -> (i32, i32, i32) {
    %c0_i32 = arith.constant 0 : i32
    %c0_i32_0 = arith.constant 0 : i32
    %c0_i32_1 = arith.constant 0 : i32
    return %arg1, %c0_i32, %c0_i32_0 : i32, i32, i32
  }
  func.func @transform_9(%arg0: i32, %arg1: i32) -> (i32, i32, i32) {
    %c0_i32 = arith.constant 0 : i32
    %c0_i32_0 = arith.constant 0 : i32
    %c0_i32_1 = arith.constant 0 : i32
    return %arg1, %c0_i32, %c0_i32_0 : i32, i32, i32
  }
  func.func @transform_10(%arg0: i32, %arg1: i32) -> (i32, i32, i32) {
    %c0_i32 = arith.constant 0 : i32
    %c0_i32_0 = arith.constant 0 : i32
    %c0_i32_1 = arith.constant 0 : i32
    return %arg1, %c0_i32, %c0_i32_0 : i32, i32, i32
  }
  func.func @transform_11(%arg0: i32, %arg1: i32) -> (i32, i32, i32) {
    %c0_i32 = arith.constant 0 : i32
    %c0_i32_0 = arith.constant 0 : i32
    %c0_i32_1 = arith.constant 0 : i32
    return %arg1, %c0_i32, %c0_i32_0 : i32, i32, i32
  }
  func.func @transform_12(%arg0: i32, %arg1: i32) -> (i32, i32, i32) {
    %c0_i32 = arith.constant 0 : i32
    %c0_i32_0 = arith.constant 0 : i32
    %c0_i32_1 = arith.constant 0 : i32
    return %arg1, %c0_i32, %c0_i32_0 : i32, i32, i32
  }
  func.func @transform_13(%arg0: i32, %arg1: i32) -> (i32, i32, i32) {
    %c0_i32 = arith.constant 0 : i32
    %c0_i32_0 = arith.constant 0 : i32
    %c0_i32_1 = arith.constant 0 : i32
    return %arg1, %c0_i32, %c0_i32_0 : i32, i32, i32
  }
  func.func @transform_14(%arg0: i32, %arg1: i32) -> (i32, i32, i32) {
    %c0_i32 = arith.constant 0 : i32
    %c0_i32_0 = arith.constant 0 : i32
    %c0_i32_1 = arith.constant 0 : i32
    return %arg0, %c0_i32, %c0_i32_0 : i32, i32, i32
  }
}

</mosaic_0001>

<llo_original>
// kernel: tpu_custom_call.1
$region0: #{tpu_custom_call.1}
  #allocation0 [shape = 'u32[]', space=smem, size = 0x4, offset = 0x4, fixed_abs, tag = 'smem constant byte address 0x4 - core index']
  #allocation1 [shape = 'u32[72,128]{1,0:T(1,128)}', space=vmem, size = 0x9000, scoped, tag = 'internal scratch']
  #allocation2 [shape = 'f32[16,32]{1,0:T(8,128)}', space=vmem, size = 0x2000, scoped, tag = 'scratch operand']
  %s0 = inlined_call_operand.hbm [shape: f32[2,8,32], index: 0, kind: input, shape index: {}]
  %s1 = inlined_call_operand.hbm [shape: f32[2,1,8], index: 1, kind: input, shape index: {}]
  %s2 = inlined_call_operand.vmem [shape: f32[2,32,96], index: 2, kind: input, shape index: {}]
  %s3 = inlined_call_operand.vmem [shape: f32[2,1,96], index: 3, kind: input, shape index: {}]
  %s4 = inlined_call_operand.vmem [shape: f32[2,32,32], index: 4, kind: input, shape index: {}]
  %s5 = inlined_call_operand.hbm [shape: f32[2,1,32], index: 5, kind: input, shape index: {}]
  %s6 = inlined_call_operand.vmem [shape: f32[2,1,32], index: 6, kind: input, shape index: {}]
  %s7 = inlined_call_operand.hbm [shape: f32[2,1,32], index: 7, kind: input, shape index: {}]
  %s8 = inlined_call_operand.vmem [shape: f32[2,32,64], index: 8, kind: input, shape index: {}]
  %s9 = inlined_call_operand.vmem [shape: f32[2,1,64], index: 9, kind: input, shape index: {}]
  %s10 = inlined_call_operand.vmem [shape: f32[2,64,32], index: 10, kind: input, shape index: {}]
  %s11 = inlined_call_operand.vmem [shape: f32[2,1,32], index: 11, kind: input, shape index: {}]
  %s12 = inlined_call_operand.vmem [shape: f32[2,1,32], index: 12, kind: input, shape index: {}]
  %s13 = inlined_call_operand.hbm [shape: f32[2,1,32], index: 13, kind: input, shape index: {}]
  %s14 = inlined_call_operand.hbm [shape: f32[2,8,32], index: 14, kind: output, shape index: {}]
  %s15 = sld [smem:[#allocation0]]
  $region113: #{tpu_custom_call.1} parent=0
    _
  %s17 = ssub.s32 1, %s15
  %s18 = scalar_select 0, %s17, %s15
  $region1: #{tpu_custom_call.1} parent=0
    #allocation3 [shape = 'u8[8192]{0}', space=vmem, size = 0x2000, scoped, tag = 'input window, operand 0, single buffered']
    #allocation4 [shape = 's32[2]{0}', space=sflag, size = 0x8, scoped, tag = 'scoped memory for tpu_custom_call.1']
    #allocation5 [shape = 's32[2]{0}', space=sflag, size = 0x8, scoped, tag = 'scoped memory for tpu_custom_call.1']
    #allocation6 [shape = 'u8[1024]{0}', space=vmem, size = 0x400, scoped, tag = 'input window, operand 1, single buffered']
    #allocation7 [shape = 's32[1]{0}', space=sflag, size = 0x4, scoped, tag = 'scoped memory for tpu_custom_call.1']
    #allocation8 [shape = 'u8[1024]{0}', space=vmem, size = 0x400, scoped, tag = 'input window, operand 5']
    #allocation9 [shape = 'u8[1024]{0}', space=vmem, size = 0x400, scoped, tag = 'input window, operand 7']
    #allocation10 [shape = 'u8[1024]{0}', space=vmem, size = 0x400, scoped, tag = 'input window, operand 13']
    #allocation11 [shape = 'u8[8192]{0}', space=vmem, size = 0x2000, scoped, tag = 'output window, operand 0, single buffered']
    %19 = vsyncpa [#allocation4], 0
    %20 = vsyncpa [#allocation7], 0
    %21 = vsyncpa [#allocation5], 0
    loop: start=0, step=1, limit=4
    $region2: #{tpu_custom_call.1} parent=1 // loop_pre_header
      _
    $region3: #{tpu_custom_call.1} parent=1 // loop_header
      %s23 = sphi 0, %s27
      %p24 = scmp.ge.s32.totalorder %s23, 4
      %s30 = sphi 0, %s42
      %s31 = sphi 0, %s38
      %s32 = sphi 0, %s30
      %s33 = sphi 0, %s31
      %s34 = sphi 0, %s32
      %s35 = sphi 0, %s33
      %s45 = sphi 0, %s47
      %s48 = sphi 0, %s45
      %s49 = sphi 0, %s48
      %s65 = sphi 0, %s49
      %s71 = sphi 0, %s73
      %s74 = sphi 0, %s71
      %s75 = sphi 0, %s74
      %s91 = sphi 0, %s75
      %s97 = sphi 0, %s99
      %s100 = sphi 0, %s97
      %s101 = sphi 0, %s100
      %s117 = sphi 0, %s101
      %s123 = sphi 0, %s125
      %s126 = sphi 0, %s123
      %s127 = sphi 0, %s126
      %s143 = sphi 0, %s127
      %s149 = sphi 0, %s151
      %s152 = sphi 0, %s149
      %s153 = sphi 0, %s152
      %s169 = sphi 0, %s153
      %s175 = sphi 0, %s177
      %s178 = sphi 0, %s175
      %s179 = sphi 0, %s178
      %s195 = sphi 0, %s179
      %s201 = sphi 0, %s203
      %s204 = sphi 0, %s201
      %s205 = sphi 0, %s204
      %s221 = sphi 0, %s205
      %s227 = sphi 0, %s229
      %s230 = sphi 0, %s227
      %s231 = sphi 0, %s230
      %s247 = sphi 0, %s231
      %s253 = sphi 0, %s255
      %s256 = sphi 0, %s253
      %s257 = sphi 0, %s256
      %s273 = sphi 0, %s257
      %s279 = sphi 0, %s281
      %s282 = sphi 0, %s279
      %s283 = sphi 0, %s282
      %s299 = sphi 0, %s283
      %s305 = sphi 0, %s307
      %s308 = sphi 0, %s305
      %s309 = sphi 0, %s308
      %s325 = sphi 0, %s309
      %s331 = sphi 0, %s333
      %s334 = sphi 0, %s331
      %s335 = sphi 0, %s334
      %s351 = sphi 0, %s335
      %s357 = sphi 0, %s359
      %s360 = sphi 0, %s357
      %s361 = sphi 0, %s360
      %s377 = sphi 0, %s361
      %s383 = sphi 0, %s385
      %s386 = sphi 0, %s383
      %s387 = sphi 0, %s386
      %s403 = sphi 0, %s387
      %s409 = sphi 0, %s411
      %s412 = sphi 0, %s409
      %s413 = sphi 0, %s412
      %s429 = sphi 0, %s413
    $region4: #{tpu_custom_call.1} parent=1 // loop_header_branch
      %26 = sbr.rel (%p24) target = $region8
    $region5: #{tpu_custom_call.1} parent=1 // loop_body
      %s28 = ssub.s32 %s23, 1
      %s29 = ssub.s32 %s23, 2
      %s36 = sadd.s32 1, %s31
      %p37 = scmp.ge.s32.totalorder %s36, 2
      %s38 = scalar_select %p37, 0, %s36
      %s39 = sadd.s32 1, %s30
      %s40 = scalar_select %p37, %s39, %s30
      %p41 = scmp.ge.s32.totalorder %s40, 1
      %s42 = scalar_select %p41, 0, %s40
      %s43 = ssub.s32 %s30, %s42
      %p44 = scmp.eq.s32.totalorder %s43, 0
      %s46 = sadd.s32 %s45, 1
      %s47 = scalar_select %p44, %s45, %s46
      %p50 = pneg %p44
      %p51 = scmp.eq.s32.totalorder %s23, 1
      %p52 = por %p50, %p51
      %p53 = scmp.ne.s32.totalorder %s45, %s48
      %p54 = scmp.eq.s32.totalorder %s23, 0
      %p55 = por %p53, %p54
      %p56 = scmp.ne.s32.totalorder %s45, %s48
      %p57 = scmp.eq.s32.totalorder %s28, 1
      %p58 = por %p56, %p57
      %p59 = scmp.ne.s32.totalorder %s48, %s49
      %p60 = scmp.eq.s32.totalorder %s28, 0
      %p61 = por %p59, %p60
      %p62 = scmp.ne.s32.totalorder %s48, %s49
      %p63 = scmp.eq.s32.totalorder %s29, 1
      %p64 = por %p62, %p63
      %p66 = scmp.ne.s32.totalorder %s49, %s65
      %p67 = scmp.eq.s32.totalorder %s29, 0
      %p68 = por %p66, %p67
      %s69 = ssub.s32 %s30, %s42
      %p70 = scmp.eq.s32.totalorder %s69, 0
      %s72 = sadd.s32 %s71, 1
      %s73 = scalar_select %p70, %s71, %s72
      %p76 = pneg %p70
      %p77 = scmp.eq.s32.totalorder %s23, 1
      %p78 = por %p76, %p77
      %p79 = scmp.ne.s32.totalorder %s71, %s74
      %p80 = scmp.eq.s32.totalorder %s23, 0
      %p81 = por %p79, %p80
      %p82 = scmp.ne.s32.totalorder %s71, %s74
      %p83 = scmp.eq.s32.totalorder %s28, 1
      %p84 = por %p82, %p83
      %p85 = scmp.ne.s32.totalorder %s74, %s75
      %p86 = scmp.eq.s32.totalorder %s28, 0
      %p87 = por %p85, %p86
      %p88 = scmp.ne.s32.totalorder %s74, %s75
      %p89 = scmp.eq.s32.totalorder %s29, 1
      %p90 = por %p88, %p89
      %p92 = scmp.ne.s32.totalorder %s75, %s91
      %p93 = scmp.eq.s32.totalorder %s29, 0
      %p94 = por %p92, %p93
      %s95 = ssub.s32 %s31, %s38
      %p96 = scmp.eq.s32.totalorder %s95, 0
      %s98 = sadd.s32 %s97, 1
      %s99 = scalar_select %p96, %s97, %s98
      %p102 = pneg %p96
      %p103 = scmp.eq.s32.totalorder %s23, 1
      %p104 = por %p102, %p103
      %p105 = scmp.ne.s32.totalorder %s97, %s100
      %p106 = scmp.eq.s32.totalorder %s23, 0
      %p107 = por %p105, %p106
      %p108 = scmp.ne.s32.totalorder %s97, %s100
      %p109 = scmp.eq.s32.totalorder %s28, 1
      %p110 = por %p108, %p109
      %p111 = scmp.ne.s32.totalorder %s100, %s101
      %p112 = scmp.eq.s32.totalorder %s28, 0
      %p113 = por %p111, %p112
      %p114 = scmp.ne.s32.totalorder %s100, %s101
      %p115 = scmp.eq.s32.totalorder %s29, 1
      %p116 = por %p114, %p115
      %p118 = scmp.ne.s32.totalorder %s101, %s117
      %p119 = scmp.eq.s32.totalorder %s29, 0
      %p120 = por %p118, %p119
      %s121 = ssub.s32 %s31, %s38
      %p122 = scmp.eq.s32.totalorder %s121, 0
      %s124 = sadd.s32 %s123, 1
      %s125 = scalar_select %p122, %s123, %s124
      %p128 = pneg %p122
      %p129 = scmp.eq.s32.totalorder %s23, 1
      %p130 = por %p128, %p129
      %p131 = scmp.ne.s32.totalorder %s123, %s126
      %p132 = scmp.eq.s32.totalorder %s23, 0
      %p133 = por %p131, %p132
      %p134 = scmp.ne.s32.totalorder %s123, %s126
      %p135 = scmp.eq.s32.totalorder %s28, 1
      %p136 = por %p134, %p135
      %p137 = scmp.ne.s32.totalorder %s126, %s127
      %p138 = scmp.eq.s32.totalorder %s28, 0
      %p139 = por %p137, %p138
      %p140 = scmp.ne.s32.totalorder %s126, %s127
      %p141 = scmp.eq.s32.totalorder %s29, 1
      %p142 = por %p140, %p141
      %p144 = scmp.ne.s32.totalorder %s127, %s143
      %p145 = scmp.eq.s32.totalorder %s29, 0
      %p146 = por %p144, %p145
      %s147 = ssub.s32 %s31, %s38
      %p148 = scmp.eq.s32.totalorder %s147, 0
      %s150 = sadd.s32 %s149, 1
      %s151 = scalar_select %p148, %s149, %s150
      %p154 = pneg %p148
      %p155 = scmp.eq.s32.totalorder %s23, 1
      %p156 = por %p154, %p155
      %p157 = scmp.ne.s32.totalorder %s149, %s152
      %p158 = scmp.eq.s32.totalorder %s23, 0
      %p159 = por %p157, %p158
      %p160 = scmp.ne.s32.totalorder %s149, %s152
      %p161 = scmp.eq.s32.totalorder %s28, 1
      %p162 = por %p160, %p161
      %p163 = scmp.ne.s32.totalorder %s152, %s153
      %p164 = scmp.eq.s32.totalorder %s28, 0
      %p165 = por %p163, %p164
      %p166 = scmp.ne.s32.totalorder %s152, %s153
      %p167 = scmp.eq.s32.totalorder %s29, 1
      %p168 = por %p166, %p167
      %p170 = scmp.ne.s32.totalorder %s153, %s169
      %p171 = scmp.eq.s32.totalorder %s29, 0
      %p172 = por %p170, %p171
      %s173 = ssub.s32 %s31, %s38
      %p174 = scmp.eq.s32.totalorder %s173, 0
      %s176 = sadd.s32 %s175, 1
      %s177 = scalar_select %p174, %s175, %s176
      %p180 = pneg %p174
      %p181 = scmp.eq.s32.totalorder %s23, 1
      %p182 = por %p180, %p181
      %p183 = scmp.ne.s32.totalorder %s175, %s178
      %p184 = scmp.eq.s32.totalorder %s23, 0
      %p185 = por %p183, %p184
      %p186 = scmp.ne.s32.totalorder %s175, %s178
      %p187 = scmp.eq.s32.totalorder %s28, 1
      %p188 = por %p186, %p187
      %p189 = scmp.ne.s32.totalorder %s178, %s179
      %p190 = scmp.eq.s32.totalorder %s28, 0
      %p191 = por %p189, %p190
      %p192 = scmp.ne.s32.totalorder %s178, %s179
      %p193 = scmp.eq.s32.totalorder %s29, 1
      %p194 = por %p192, %p193
      %p196 = scmp.ne.s32.totalorder %s179, %s195
      %p197 = scmp.eq.s32.totalorder %s29, 0
      %p198 = por %p196, %p197
      %s199 = ssub.s32 %s31, %s38
      %p200 = scmp.eq.s32.totalorder %s199, 0
      %s202 = sadd.s32 %s201, 1
      %s203 = scalar_select %p200, %s201, %s202
      %p206 = pneg %p200
      %p207 = scmp.eq.s32.totalorder %s23, 1
      %p208 = por %p206, %p207
      %p209 = scmp.ne.s32.totalorder %s201, %s204
      %p210 = scmp.eq.s32.totalorder %s23, 0
      %p211 = por %p209, %p210
      %p212 = scmp.ne.s32.totalorder %s201, %s204
      %p213 = scmp.eq.s32.totalorder %s28, 1
      %p214 = por %p212, %p213
      %p215 = scmp.ne.s32.totalorder %s204, %s205
      %p216 = scmp.eq.s32.totalorder %s28, 0
      %p217 = por %p215, %p216
      %p218 = scmp.ne.s32.totalorder %s204, %s205
      %p219 = scmp.eq.s32.totalorder %s29, 1
      %p220 = por %p218, %p219
      %p222 = scmp.ne.s32.totalorder %s205, %s221
      %p223 = scmp.eq.s32.totalorder %s29, 0
      %p224 = por %p222, %p223
      %s225 = ssub.s32 %s31, %s38
      %p226 = scmp.eq.s32.totalorder %s225, 0
      %s228 = sadd.s32 %s227, 1
      %s229 = scalar_select %p226, %s227, %s228
      %p232 = pneg %p226
      %p233 = scmp.eq.s32.totalorder %s23, 1
      %p234 = por %p232, %p233
      %p235 = scmp.ne.s32.totalorder %s227, %s230
      %p236 = scmp.eq.s32.totalorder %s23, 0
      %p237 = por %p235, %p236
      %p238 = scmp.ne.s32.totalorder %s227, %s230
      %p239 = scmp.eq.s32.totalorder %s28, 1
      %p240 = por %p238, %p239
      %p241 = scmp.ne.s32.totalorder %s230, %s231
      %p242 = scmp.eq.s32.totalorder %s28, 0
      %p243 = por %p241, %p242
      %p244 = scmp.ne.s32.totalorder %s230, %s231
      %p245 = scmp.eq.s32.totalorder %s29, 1
      %p246 = por %p244, %p245
      %p248 = scmp.ne.s32.totalorder %s231, %s247
      %p249 = scmp.eq.s32.totalorder %s29, 0
      %p250 = por %p248, %p249
      %s251 = ssub.s32 %s31, %s38
      %p252 = scmp.eq.s32.totalorder %s251, 0
      %s254 = sadd.s32 %s253, 1
      %s255 = scalar_select %p252, %s253, %s254
      %p258 = pneg %p252
      %p259 = scmp.eq.s32.totalorder %s23, 1
      %p260 = por %p258, %p259
      %p261 = scmp.ne.s32.totalorder %s253, %s256
      %p262 = scmp.eq.s32.totalorder %s23, 0
      %p263 = por %p261, %p262
      %p264 = scmp.ne.s32.totalorder %s253, %s256
      %p265 = scmp.eq.s32.totalorder %s28, 1
      %p266 = por %p264, %p265
      %p267 = scmp.ne.s32.totalorder %s256, %s257
      %p268 = scmp.eq.s32.totalorder %s28, 0
      %p269 = por %p267, %p268
      %p270 = scmp.ne.s32.totalorder %s256, %s257
      %p271 = scmp.eq.s32.totalorder %s29, 1
      %p272 = por %p270, %p271
      %p274 = scmp.ne.s32.totalorder %s257, %s273
      %p275 = scmp.eq.s32.totalorder %s29, 0
      %p276 = por %p274, %p275
      %s277 = ssub.s32 %s31, %s38
      %p278 = scmp.eq.s32.totalorder %s277, 0
      %s280 = sadd.s32 %s279, 1
      %s281 = scalar_select %p278, %s279, %s280
      %p284 = pneg %p278
      %p285 = scmp.eq.s32.totalorder %s23, 1
      %p286 = por %p284, %p285
      %p287 = scmp.ne.s32.totalorder %s279, %s282
      %p288 = scmp.eq.s32.totalorder %s23, 0
      %p289 = por %p287, %p288
      %p290 = scmp.ne.s32.totalorder %s279, %s282
      %p291 = scmp.eq.s32.totalorder %s28, 1
      %p292 = por %p290, %p291
      %p293 = scmp.ne.s32.totalorder %s282, %s283
      %p294 = scmp.eq.s32.totalorder %s28, 0
      %p295 = por %p293, %p294
      %p296 = scmp.ne.s32.totalorder %s282, %s283
      %p297 = scmp.eq.s32.totalorder %s29, 1
      %p298 = por %p296, %p297
      %p300 = scmp.ne.s32.totalorder %s283, %s299
      %p301 = scmp.eq.s32.totalorder %s29, 0
      %p302 = por %p300, %p301
      %s303 = ssub.s32 %s31, %s38
      %p304 = scmp.eq.s32.totalorder %s303, 0
      %s306 = sadd.s32 %s305, 1
      %s307 = scalar_select %p304, %s305, %s306
      %p310 = pneg %p304
      %p311 = scmp.eq.s32.totalorder %s23, 1
      %p312 = por %p310, %p311
      %p313 = scmp.ne.s32.totalorder %s305, %s308
      %p314 = scmp.eq.s32.totalorder %s23, 0
      %p315 = por %p313, %p314
      %p316 = scmp.ne.s32.totalorder %s305, %s308
      %p317 = scmp.eq.s32.totalorder %s28, 1
      %p318 = por %p316, %p317
      %p319 = scmp.ne.s32.totalorder %s308, %s309
      %p320 = scmp.eq.s32.totalorder %s28, 0
      %p321 = por %p319, %p320
      %p322 = scmp.ne.s32.totalorder %s308, %s309
      %p323 = scmp.eq.s32.totalorder %s29, 1
      %p324 = por %p322, %p323
      %p326 = scmp.ne.s32.totalorder %s309, %s325
      %p327 = scmp.eq.s32.totalorder %s29, 0
      %p328 = por %p326, %p327
      %s329 = ssub.s32 %s31, %s38
      %p330 = scmp.eq.s32.totalorder %s329, 0
      %s332 = sadd.s32 %s331, 1
      %s333 = scalar_select %p330, %s331, %s332
      %p336 = pneg %p330
      %p337 = scmp.eq.s32.totalorder %s23, 1
      %p338 = por %p336, %p337
      %p339 = scmp.ne.s32.totalorder %s331, %s334
      %p340 = scmp.eq.s32.totalorder %s23, 0
      %p341 = por %p339, %p340
      %p342 = scmp.ne.s32.totalorder %s331, %s334
      %p343 = scmp.eq.s32.totalorder %s28, 1
      %p344 = por %p342, %p343
      %p345 = scmp.ne.s32.totalorder %s334, %s335
      %p346 = scmp.eq.s32.totalorder %s28, 0
      %p347 = por %p345, %p346
      %p348 = scmp.ne.s32.totalorder %s334, %s335
      %p349 = scmp.eq.s32.totalorder %s29, 1
      %p350 = por %p348, %p349
      %p352 = scmp.ne.s32.totalorder %s335, %s351
      %p353 = scmp.eq.s32.totalorder %s29, 0
      %p354 = por %p352, %p353
      %s355 = ssub.s32 %s31, %s38
      %p356 = scmp.eq.s32.totalorder %s355, 0
      %s358 = sadd.s32 %s357, 1
      %s359 = scalar_select %p356, %s357, %s358
      %p362 = pneg %p356
      %p363 = scmp.eq.s32.totalorder %s23, 1
      %p364 = por %p362, %p363
      %p365 = scmp.ne.s32.totalorder %s357, %s360
      %p366 = scmp.eq.s32.totalorder %s23, 0
      %p367 = por %p365, %p366
      %p368 = scmp.ne.s32.totalorder %s357, %s360
      %p369 = scmp.eq.s32.totalorder %s28, 1
      %p370 = por %p368, %p369
      %p371 = scmp.ne.s32.totalorder %s360, %s361
      %p372 = scmp.eq.s32.totalorder %s28, 0
      %p373 = por %p371, %p372
      %p374 = scmp.ne.s32.totalorder %s360, %s361
      %p375 = scmp.eq.s32.totalorder %s29, 1
      %p376 = por %p374, %p375
      %p378 = scmp.ne.s32.totalorder %s361, %s377
      %p379 = scmp.eq.s32.totalorder %s29, 0
      %p380 = por %p378, %p379
      %s381 = ssub.s32 %s31, %s38
      %p382 = scmp.eq.s32.totalorder %s381, 0
      %s384 = sadd.s32 %s383, 1
      %s385 = scalar_select %p382, %s383, %s384
      %p388 = pneg %p382
      %p389 = scmp.eq.s32.totalorder %s23, 1
      %p390 = por %p388, %p389
      %p391 = scmp.ne.s32.totalorder %s383, %s386
      %p392 = scmp.eq.s32.totalorder %s23, 0
      %p393 = por %p391, %p392
      %p394 = scmp.ne.s32.totalorder %s383, %s386
      %p395 = scmp.eq.s32.totalorder %s28, 1
      %p396 = por %p394, %p395
      %p397 = scmp.ne.s32.totalorder %s386, %s387
      %p398 = scmp.eq.s32.totalorder %s28, 0
      %p399 = por %p397, %p398
      %p400 = scmp.ne.s32.totalorder %s386, %s387
      %p401 = scmp.eq.s32.totalorder %s29, 1
      %p402 = por %p400, %p401
      %p404 = scmp.ne.s32.totalorder %s387, %s403
      %p405 = scmp.eq.s32.totalorder %s29, 0
      %p406 = por %p404, %p405
      %s407 = ssub.s32 %s30, %s42
      %p408 = scmp.eq.s32.totalorder %s407, 0
      %s410 = sadd.s32 %s409, 1
      %s411 = scalar_select %p408, %s409, %s410
      %p414 = pneg %p408
      %p415 = scmp.eq.s32.totalorder %s23, 1
      %p416 = por %p414, %p415
      %p417 = scmp.ne.s32.totalorder %s409, %s412
      %p418 = scmp.eq.s32.totalorder %s23, 0
      %p419 = por %p417, %p418
      %p420 = scmp.ne.s32.totalorder %s409, %s412
      %p421 = scmp.eq.s32.totalorder %s28, 1
      %p422 = por %p420, %p421
      %p423 = scmp.ne.s32.totalorder %s412, %s413
      %p424 = scmp.eq.s32.totalorder %s28, 0
      %p425 = por %p423, %p424
      %p426 = scmp.ne.s32.totalorder %s412, %s413
      %p427 = scmp.eq.s32.totalorder %s29, 1
      %p428 = por %p426, %p427
      %p430 = scmp.ne.s32.totalorder %s413, %s429
      %p431 = scmp.eq.s32.totalorder %s29, 0
      %p432 = por %p430, %p431
      %p433 = scmp.le.s32.totalorder 1, %s23
      %p434 = scmp.lt.s32.totalorder %s23, 3
      %p435 = pnand %p433, %p434
      %p436 = pneg %p435
      // Predicated region
      $region9: #{tpu_custom_call.1} parent=5 // pred_check
        _
      $region10: #{tpu_custom_call.1} parent=5 // pred_check_branch
        %438 = sbr.rel (%p435) target = $region12
      $region11: #{tpu_custom_call.1} parent=5 // pred_region
        %s439 = ssub.s32 %s23, 1
        // Predicated region
        $region13: #{tpu_custom_call.1} parent=11 // pred_check
          %p440 = pneg %p61
        $region14: #{tpu_custom_call.1} parent=11 // pred_check_branch
          %442 = sbr.rel (%p440) target = $region16
        $region15: #{tpu_custom_call.1} parent=11 // pred_region
          %s443 = smul.u32 2, %s32
          %445 = vsyncadd [#allocation4], 0
          %s446 = smul.addr %s443, 8
          %s447 = scalar_lea.hbm %s0, %s446
          %s448 = sshll.u32 %s447, 4
          %s449 = int_to_ptr.hbm [resolvable:$true] %s448
          %s450 = sshll.u32 [#allocation3], 4
          %s451 = int_to_ptr.vmem [resolvable:$true] %s450
          %456 = dma.hbm_to_vmem [thread:$0]  %s449, 256, %s451, [#allocation4], 128, 128, 8
        $region16: #{tpu_custom_call.1} parent=11 // pred_fallthru
          _
        // Predicated region
        $region17: #{tpu_custom_call.1} parent=11 // pred_check
          %p457 = pneg %p87
        $region18: #{tpu_custom_call.1} parent=11 // pred_check_branch
          %459 = sbr.rel (%p457) target = $region20
        $region19: #{tpu_custom_call.1} parent=11 // pred_region
          %s460 = smul.u32 2, %s32
          %462 = vsyncadd [#allocation7], 0
          %s463 = scalar_lea.hbm %s1, %s460
          %s464 = sshll.u32 %s463, 4
          %s465 = int_to_ptr.hbm [resolvable:$true] %s464
          %s466 = sshll.u32 [#allocation6], 4
          %s467 = int_to_ptr.vmem [resolvable:$true] %s466
          %472 = dma.hbm_to_vmem [thread:$0]  %s465, 32, %s467, [#allocation7], 16, 16, 1
        $region20: #{tpu_custom_call.1} parent=11 // pred_fallthru
          _
      $region12: #{tpu_custom_call.1} parent=5 // pred_fallthru
        _
      %p473 = scmp.lt.s32.totalorder %s23, 2
      // Predicated region
      $region21: #{tpu_custom_call.1} parent=5 // pred_check
        %p474 = pneg %p473
      $region22: #{tpu_custom_call.1} parent=5 // pred_check_branch
        %476 = sbr.rel (%p474) target = $region24
      $region23: #{tpu_custom_call.1} parent=5 // pred_region
        // Predicated region
        $region25: #{tpu_custom_call.1} parent=23 // pred_check
          %p477 = pneg %p107
        $region26: #{tpu_custom_call.1} parent=23 // pred_check_branch
          %479 = sbr.rel (%p477) target = $region28
        $region27: #{tpu_custom_call.1} parent=23 // pred_region
          %p480 = scmp.lt.s32.totalorder %s31, 1
          %s481 = scalar_select %p480, %s31, 1
          %s482 = smul.addr %s481, 4
          %s483 = smul.addr %s482, 8
          %s484 = scalar_lea.vmem %s2, %s483
        $region28: #{tpu_custom_call.1} parent=23 // pred_fallthru
          _
        // Predicated region
        $region29: #{tpu_custom_call.1} parent=23 // pred_check
          %p485 = pneg %p133
        $region30: #{tpu_custom_call.1} parent=23 // pred_check_branch
          %487 = sbr.rel (%p485) target = $region32
        $region31: #{tpu_custom_call.1} parent=23 // pred_region
          %p488 = scmp.lt.s32.totalorder %s31, 1
          %s489 = scalar_select %p488, %s31, 1
          %s490 = scalar_lea.vmem %s3, %s489
        $region32: #{tpu_custom_call.1} parent=23 // pred_fallthru
          _
        // Predicated region
        $region33: #{tpu_custom_call.1} parent=23 // pred_check
          %p491 = pneg %p159
        $region34: #{tpu_custom_call.1} parent=23 // pred_check_branch
          %493 = sbr.rel (%p491) target = $region36
        $region35: #{tpu_custom_call.1} parent=23 // pred_region
          %p494 = scmp.lt.s32.totalorder %s31, 1
          %s495 = scalar_select %p494, %s31, 1
          %s496 = smul.addr %s495, 4
          %s497 = smul.addr %s496, 8
          %s498 = scalar_lea.vmem %s4, %s497
        $region36: #{tpu_custom_call.1} parent=23 // pred_fallthru
          _
        // Predicated region
        $region37: #{tpu_custom_call.1} parent=23 // pred_check
          %p499 = pneg %p185
        $region38: #{tpu_custom_call.1} parent=23 // pred_check_branch
          %501 = sbr.rel (%p499) target = $region40
        $region39: #{tpu_custom_call.1} parent=23 // pred_region
          %s502 = sand.u32 %s23, 1
          %s503 = scalar_lea.sflag [#allocation4], %s502
          %s504 = sand.u32 %s175, 1
          %s505 = scalar_lea.vmem [#allocation8], %s504
          %507 = vsyncadd %s503, 0
          %s508 = scalar_lea.hbm %s5, %s31
          %s510 = sshll.u32 %s508, 4
          %s511 = int_to_ptr.hbm [resolvable:$true] %s510
          %s512 = sshll.u32 %s505, 4
          %s513 = int_to_ptr.vmem [resolvable:$true] %s512
          %515 = dma.hbm_to_vmem [thread:$0]  %s511, 16, %s513, %s503
        $region40: #{tpu_custom_call.1} parent=23 // pred_fallthru
          _
        // Predicated region
        $region41: #{tpu_custom_call.1} parent=23 // pred_check
          %p516 = pneg %p211
        $region42: #{tpu_custom_call.1} parent=23 // pred_check_branch
          %518 = sbr.rel (%p516) target = $region44
        $region43: #{tpu_custom_call.1} parent=23 // pred_region
          %p519 = scmp.lt.s32.totalorder %s31, 1
          %s520 = scalar_select %p519, %s31, 1
          %s521 = scalar_lea.vmem %s6, %s520
        $region44: #{tpu_custom_call.1} parent=23 // pred_fallthru
          _
        // Predicated region
        $region45: #{tpu_custom_call.1} parent=23 // pred_check
          %p522 = pneg %p237
        $region46: #{tpu_custom_call.1} parent=23 // pred_check_branch
          %524 = sbr.rel (%p522) target = $region48
        $region47: #{tpu_custom_call.1} parent=23 // pred_region
          %s525 = sand.u32 %s23, 1
          %s526 = scalar_lea.sflag [#allocation4], %s525
          %s527 = sand.u32 %s227, 1
          %s528 = scalar_lea.vmem [#allocation9], %s527
          %530 = vsyncadd %s526, 0
          %s531 = scalar_lea.hbm %s7, %s31
          %s533 = sshll.u32 %s531, 4
          %s534 = int_to_ptr.hbm [resolvable:$true] %s533
          %s535 = sshll.u32 %s528, 4
          %s536 = int_to_ptr.vmem [resolvable:$true] %s535
          %538 = dma.hbm_to_vmem [thread:$0]  %s534, 16, %s536, %s526
        $region48: #{tpu_custom_call.1} parent=23 // pred_fallthru
          _
        // Predicated region
        $region49: #{tpu_custom_call.1} parent=23 // pred_check
          %p539 = pneg %p263
        $region50: #{tpu_custom_call.1} parent=23 // pred_check_branch
          %541 = sbr.rel (%p539) target = $region52
        $region51: #{tpu_custom_call.1} parent=23 // pred_region
          %p542 = scmp.lt.s32.totalorder %s31, 1
          %s543 = scalar_select %p542, %s31, 1
          %s544 = smul.addr %s543, 4
          %s545 = smul.addr %s544, 8
          %s546 = scalar_lea.vmem %s8, %s545
        $region52: #{tpu_custom_call.1} parent=23 // pred_fallthru
          _
        // Predicated region
        $region53: #{tpu_custom_call.1} parent=23 // pred_check
          %p547 = pneg %p289
        $region54: #{tpu_custom_call.1} parent=23 // pred_check_branch
          %549 = sbr.rel (%p547) target = $region56
        $region55: #{tpu_custom_call.1} parent=23 // pred_region
          %p550 = scmp.lt.s32.totalorder %s31, 1
          %s551 = scalar_select %p550, %s31, 1
          %s552 = scalar_lea.vmem %s9, %s551
        $region56: #{tpu_custom_call.1} parent=23 // pred_fallthru
          _
        // Predicated region
        $region57: #{tpu_custom_call.1} parent=23 // pred_check
          %p553 = pneg %p315
        $region58: #{tpu_custom_call.1} parent=23 // pred_check_branch
          %555 = sbr.rel (%p553) target = $region60
        $region59: #{tpu_custom_call.1} parent=23 // pred_region
          %p556 = scmp.lt.s32.totalorder %s31, 1
          %s557 = scalar_select %p556, %s31, 1
          %s558 = smul.addr %s557, 8
          %s559 = smul.addr %s558, 8
          %s560 = scalar_lea.vmem %s10, %s559
        $region60: #{tpu_custom_call.1} parent=23 // pred_fallthru
          _
        // Predicated region
        $region61: #{tpu_custom_call.1} parent=23 // pred_check
          %p561 = pneg %p341
        $region62: #{tpu_custom_call.1} parent=23 // pred_check_branch
          %563 = sbr.rel (%p561) target = $region64
        $region63: #{tpu_custom_call.1} parent=23 // pred_region
          %p564 = scmp.lt.s32.totalorder %s31, 1
          %s565 = scalar_select %p564, %s31, 1
          %s566 = scalar_lea.vmem %s11, %s565
        $region64: #{tpu_custom_call.1} parent=23 // pred_fallthru
          _
        // Predicated region
        $region65: #{tpu_custom_call.1} parent=23 // pred_check
          %p567 = pneg %p367
        $region66: #{tpu_custom_call.1} parent=23 // pred_check_branch
          %569 = sbr.rel (%p567) target = $region68
        $region67: #{tpu_custom_call.1} parent=23 // pred_region
          %p570 = scmp.lt.s32.totalorder %s31, 1
          %s571 = scalar_select %p570, %s31, 1
          %s572 = scalar_lea.vmem %s12, %s571
        $region68: #{tpu_custom_call.1} parent=23 // pred_fallthru
          _
        // Predicated region
        $region69: #{tpu_custom_call.1} parent=23 // pred_check
          %p573 = pneg %p393
        $region70: #{tpu_custom_call.1} parent=23 // pred_check_branch
          %575 = sbr.rel (%p573) target = $region72
        $region71: #{tpu_custom_call.1} parent=23 // pred_region
          %s576 = sand.u32 %s23, 1
          %s577 = scalar_lea.sflag [#allocation4], %s576
          %s578 = sand.u32 %s383, 1
          %s579 = scalar_lea.vmem [#allocation10], %s578
          %581 = vsyncadd %s577, 0
          %s582 = scalar_lea.hbm %s13, %s31
          %s584 = sshll.u32 %s582, 4
          %s585 = int_to_ptr.hbm [resolvable:$true] %s584
          %s586 = sshll.u32 %s579, 4
          %s587 = int_to_ptr.vmem [resolvable:$true] %s586
          %589 = dma.hbm_to_vmem [thread:$0]  %s585, 16, %s587, %s577
        $region72: #{tpu_custom_call.1} parent=23 // pred_fallthru
          _
      $region24: #{tpu_custom_call.1} parent=5 // pred_fallthru
        _
      %p590 = scmp.le.s32.totalorder 1, %s23
      %p591 = scmp.lt.s32.totalorder %s23, 3
      %p592 = pnand %p590, %p591
      %p593 = pneg %p592
      // Predicated region
      $region73: #{tpu_custom_call.1} parent=5 // pred_check
        _
      $region74: #{tpu_custom_call.1} parent=5 // pred_check_branch
        %595 = sbr.rel (%p592) target = $region76
      $region75: #{tpu_custom_call.1} parent=5 // pred_region
        %s596 = ssub.s32 %s23, 1
        // Predicated region
        $region77: #{tpu_custom_call.1} parent=75 // pred_check
          %p597 = pneg %p61
        $region78: #{tpu_custom_call.1} parent=75 // pred_check_branch
          %599 = sbr.rel (%p597) target = $region80
        $region79: #{tpu_custom_call.1} parent=75 // pred_region
          %601 = dma.done [#allocation4], 256
        $region80: #{tpu_custom_call.1} parent=75 // pred_fallthru
          _
        // Predicated region
        $region81: #{tpu_custom_call.1} parent=75 // pred_check
          %p602 = pneg %p87
        $region82: #{tpu_custom_call.1} parent=75 // pred_check_branch
          %604 = sbr.rel (%p602) target = $region84
        $region83: #{tpu_custom_call.1} parent=75 // pred_region
          %606 = dma.done [#allocation7], 32
        $region84: #{tpu_custom_call.1} parent=75 // pred_fallthru
          _
        %s607 = sand.u32 %s28, 1
        %s608 = scalar_lea.sflag [#allocation4], %s607
        %s609 = sand.u32 %s178, 1
        %s610 = scalar_lea.vmem [#allocation8], %s609
        // Predicated region
        $region85: #{tpu_custom_call.1} parent=75 // pred_check
          %p611 = pneg %p191
        $region86: #{tpu_custom_call.1} parent=75 // pred_check_branch
          %613 = sbr.rel (%p611) target = $region88
        $region87: #{tpu_custom_call.1} parent=75 // pred_region
          %615 = dma.done %s608, 16
        $region88: #{tpu_custom_call.1} parent=75 // pred_fallthru
          _
        %s616 = sand.u32 %s28, 1
        %s617 = scalar_lea.sflag [#allocation4], %s616
        %s618 = sand.u32 %s230, 1
        %s619 = scalar_lea.vmem [#allocation9], %s618
        // Predicated region
        $region89: #{tpu_custom_call.1} parent=75 // pred_check
          %p620 = pneg %p243
        $region90: #{tpu_custom_call.1} parent=75 // pred_check_branch
          %622 = sbr.rel (%p620) target = $region92
        $region91: #{tpu_custom_call.1} parent=75 // pred_region
          %624 = dma.done %s617, 16
        $region92: #{tpu_custom_call.1} parent=75 // pred_fallthru
          _
        %s625 = sand.u32 %s28, 1
        %s626 = scalar_lea.sflag [#allocation4], %s625
        %s627 = sand.u32 %s386, 1
        %s628 = scalar_lea.vmem [#allocation10], %s627
        // Predicated region
        $region93: #{tpu_custom_call.1} parent=75 // pred_check
          %p629 = pneg %p399
        $region94: #{tpu_custom_call.1} parent=75 // pred_check_branch
          %631 = sbr.rel (%p629) target = $region96
        $region95: #{tpu_custom_call.1} parent=75 // pred_region
          %633 = dma.done %s626, 16
        $region96: #{tpu_custom_call.1} parent=75 // pred_fallthru
          _
        %p634 = pneg %p61
        %p635 = pneg %p58
        %p636 = pneg %p87
        %p637 = pneg %p84
        %p638 = scmp.lt.s32.totalorder %s33, 1
        %s639 = scalar_select %p638, %s33, 1
        %s640 = smul.addr %s639, 4
        %s641 = smul.addr %s640, 8
        %s642 = scalar_lea.vmem %s2, %s641
        %p643 = pneg %p113
        %p644 = pneg %p110
        %p645 = scmp.lt.s32.totalorder %s33, 1
        %s646 = scalar_select %p645, %s33, 1
        %s647 = scalar_lea.vmem %s3, %s646
        %p648 = pneg %p139
        %p649 = pneg %p136
        %p650 = scmp.lt.s32.totalorder %s33, 1
        %s651 = scalar_select %p650, %s33, 1
        %s652 = smul.addr %s651, 4
        %s653 = smul.addr %s652, 8
        %s654 = scalar_lea.vmem %s4, %s653
        %p655 = pneg %p165
        %p656 = pneg %p162
        %s657 = sand.u32 %s28, 1
        %s658 = scalar_lea.sflag [#allocation4], %s657
        %s659 = sand.u32 %s178, 1
        %s660 = scalar_lea.vmem [#allocation8], %s659
        %p661 = pneg %p191
        %p662 = pneg %p188
        %p663 = scmp.lt.s32.totalorder %s33, 1
        %s664 = scalar_select %p663, %s33, 1
        %s665 = scalar_lea.vmem %s6, %s664
        %p666 = pneg %p217
        %p667 = pneg %p214
        %s668 = sand.u32 %s28, 1
        %s669 = scalar_lea.sflag [#allocation4], %s668
        %s670 = sand.u32 %s230, 1
        %s671 = scalar_lea.vmem [#allocation9], %s670
        %p672 = pneg %p243
        %p673 = pneg %p240
        %p674 = scmp.lt.s32.totalorder %s33, 1
        %s675 = scalar_select %p674, %s33, 1
        %s676 = smul.addr %s675, 4
        %s677 = smul.addr %s676, 8
        %s678 = scalar_lea.vmem %s8, %s677
        %p679 = pneg %p269
        %p680 = pneg %p266
        %p681 = scmp.lt.s32.totalorder %s33, 1
        %s682 = scalar_select %p681, %s33, 1
        %s683 = scalar_lea.vmem %s9, %s682
        %p684 = pneg %p295
        %p685 = pneg %p292
        %p686 = scmp.lt.s32.totalorder %s33, 1
        %s687 = scalar_select %p686, %s33, 1
        %s688 = smul.addr %s687, 8
        %s689 = smul.addr %s688, 8
        %s690 = scalar_lea.vmem %s10, %s689
        %p691 = pneg %p321
        %p692 = pneg %p318
        %p693 = scmp.lt.s32.totalorder %s33, 1
        %s694 = scalar_select %p693, %s33, 1
        %s695 = scalar_lea.vmem %s11, %s694
        %p696 = pneg %p347
        %p697 = pneg %p344
        %p698 = scmp.lt.s32.totalorder %s33, 1
        %s699 = scalar_select %p698, %s33, 1
        %s700 = scalar_lea.vmem %s12, %s699
        %p701 = pneg %p373
        %p702 = pneg %p370
        %s703 = sand.u32 %s28, 1
        %s704 = scalar_lea.sflag [#allocation4], %s703
        %s705 = sand.u32 %s386, 1
        %s706 = scalar_lea.vmem [#allocation10], %s705
        %p707 = pneg %p399
        %p708 = pneg %p396
        %p709 = pneg %p425
        %p710 = pneg %p422
        %s711 = smul.u32 2, %s32
        %s712 = smul.u32 2, %s32
        %p713 = scmp.lt.s32.totalorder %s33, 1
        %s714 = scalar_select %p713, %s33, 1
        %s715 = smul.addr %s714, 4
        %s716 = smul.addr %s715, 8
        %s717 = scalar_lea.vmem %s2, %s716
        %p718 = scmp.lt.s32.totalorder %s33, 1
        %s719 = scalar_select %p718, %s33, 1
        %s720 = scalar_lea.vmem %s3, %s719
        %p721 = scmp.lt.s32.totalorder %s33, 1
        %s722 = scalar_select %p721, %s33, 1
        %s723 = smul.addr %s722, 4
        %s724 = smul.addr %s723, 8
        %s725 = scalar_lea.vmem %s4, %s724
        %p726 = scmp.lt.s32.totalorder %s33, 1
        %s727 = scalar_select %p726, %s33, 1
        %s728 = scalar_lea.vmem %s6, %s727
        %p729 = scmp.lt.s32.totalorder %s33, 1
        %s730 = scalar_select %p729, %s33, 1
        %s731 = smul.addr %s730, 4
        %s732 = smul.addr %s731, 8
        %s733 = scalar_lea.vmem %s8, %s732
        %p734 = scmp.lt.s32.totalorder %s33, 1
        %s735 = scalar_select %p734, %s33, 1
        %s736 = scalar_lea.vmem %s9, %s735
        %p737 = scmp.lt.s32.totalorder %s33, 1
        %s738 = scalar_select %p737, %s33, 1
        %s739 = smul.addr %s738, 8
        %s740 = smul.addr %s739, 8
        %s741 = scalar_lea.vmem %s10, %s740
        %p742 = scmp.lt.s32.totalorder %s33, 1
        %s743 = scalar_select %p742, %s33, 1
        %s744 = scalar_lea.vmem %s11, %s743
        %p745 = scmp.lt.s32.totalorder %s33, 1
        %s746 = scalar_select %p745, %s33, 1
        %s747 = scalar_lea.vmem %s12, %s746
        %s748 = smul.u32 2, %s32
        %p749 = scmp.eq.s32.totalorder %s33, 0
        // Predicated region
        $region97: #{tpu_custom_call.1} parent=75 // pred_check
          %p750 = pneg %p749
        $region98: #{tpu_custom_call.1} parent=75 // pred_check_branch
          %752 = sbr.rel (%p750) target = $region100
        $region99: #{tpu_custom_call.1} parent=75 // pred_region
          %v753 = vld [vmem:[#allocation3] sm:$0xff]
          %v754 = vld [vmem:[#allocation3 + $0x8] sm:$0xff]
          %vm755 = vcmask 261120
          %756 = vst.msk [vmem:[#allocation11] sm:$0xff] %vm755, %v753
          %757 = vst.msk [vmem:[#allocation11 + $0x8] sm:$0xff] %vm755, %v754
        $region100: #{tpu_custom_call.1} parent=75 // pred_fallthru
          _
        %v758 = vld [vmem:[#allocation11] sm:$0xff]
        %v759 = vld [vmem:[#allocation11 + $0x8] sm:$0xff]
        %v760 = vld [vmem:[#allocation6] sm:$0x1]
        %v761 = vld [vmem:[#allocation6 + $0x1] sm:$0x1]
        %v762 = vld [vmem:[%s717] sm:$0xff]
        %v763 = vld [vmem:[%s717 + $0x8] sm:$0xff]
        %v764 = vld [vmem:[%s717 + $0x10] sm:$0xff]
        %v765 = vld [vmem:[%s717 + $0x18] sm:$0xff]
        %v766 = vld [vmem:[%s720] sm:$0x1]
        %v768 = vperm.slane %v766, 0
        %vm770 = vcmask 261120
        %v772 = vsel %vm770, %v758, 0
        %v775 = vsel %vm770, %v759, 0
        %777 = vmatpush.msra.mxu0 0.0
        %778 = vmatpush.msra.mxu0 0.0
        %779 = vmatpush.msra.mxu0 0.0
        %780 = vmatpush.msra.mxu0 0.0
        %781 = vmatpush.msra.mxu0 0.0
        %782 = vmatpush.msra.mxu0 0.0
        %783 = vmatpush.msra.mxu0 0.0
        %784 = vmatpush.msra.mxu0 0.0
        %785 = vmatpush.msra.mxu0 0.0
        %786 = vmatpush.msra.mxu0 0.0
        %787 = vmatpush.msra.mxu0 0.0
        %788 = vmatpush.msra.mxu0 0.0
        %789 = vmatpush.msra.mxu0 %v765
        %790 = vmatpush.msra.mxu0 %v764
        %791 = vmatpush.msra.mxu0 %v763
        %792 = vmatpush.msra.mxu0 %v762
        %793 = vmatmul.f32.gmra.mxu0 %v772
        %v794 = vpop.f32.mrf.mxu0
        %v795 = vadd.f32 %v768, %v794
        %796 = vmatmul.f32.gmra.mxu0 %v775
        %v797 = vpop.f32.mrf.mxu0
        %v798 = vadd.f32 %v768, %v797
        %799 = vdwg.mxu0
        %v800 = vmul.f32 %v795, 0.35355338
        %v801 = vmul.f32 %v798, 0.35355338
        %v804 = vperm.slane %v760, 0
        %v805 = vperm.slane %v761, 0
        %809 = vrot.lane.b32.xlu0 %v795, 96
        %v810 = vpop.permute.xlu0 %809
        %vm811 = vcmask 64512
        %v813 = vsel %vm811, %v800, 0
        %v815 = vsel %vm811, %v810, 0
        %817 = vmatpush.xpose.msra.mxu0 0.0
        %818 = vmatpush.xpose.msra.mxu0 0.0
        %819 = vmatpush.xpose.msra.mxu0 0.0
        %820 = vmatpush.xpose.msra.mxu0 0.0
        %821 = vmatpush.xpose.msra.mxu0 0.0
        %822 = vmatpush.xpose.msra.mxu0 0.0
        %823 = vmatpush.xpose.msra.mxu0 0.0
        %824 = vmatpush.xpose.msra.mxu0 0.0
        %825 = vmatpush.xpose.msra.mxu0 0.0
        %826 = vmatpush.xpose.msra.mxu0 0.0
        %827 = vmatpush.xpose.msra.mxu0 0.0
        %828 = vmatpush.xpose.msra.mxu0 0.0
        %829 = vmatpush.xpose.msra.mxu0 0.0
        %830 = vmatpush.xpose.msra.mxu0 0.0
        %831 = vmatpush.xpose.msra.mxu0 0.0
        %832 = vmatpush.xpose.msra.mxu0 %v815
        %833 = vmatmul.f32.gmra.mxu0 %v813
        %v834 = vpop.f32.mrf.mxu0
        %v835 = vadd.f32 %v804, %v834
        %836 = vdwg.mxu0
        %838 = vrot.lane.b32.xlu0 %v798, 96
        %v839 = vpop.permute.xlu0 %838
        %v841 = vsel %vm811, %v801, 0
        %v843 = vsel %vm811, %v839, 0
        %845 = vmatpush.xpose.msra.mxu0 0.0
        %846 = vmatpush.xpose.msra.mxu0 0.0
        %847 = vmatpush.xpose.msra.mxu0 0.0
        %848 = vmatpush.xpose.msra.mxu0 0.0
        %849 = vmatpush.xpose.msra.mxu0 0.0
        %850 = vmatpush.xpose.msra.mxu0 0.0
        %851 = vmatpush.xpose.msra.mxu0 0.0
        %852 = vmatpush.xpose.msra.mxu0 0.0
        %853 = vmatpush.xpose.msra.mxu0 0.0
        %854 = vmatpush.xpose.msra.mxu0 0.0
        %855 = vmatpush.xpose.msra.mxu0 0.0
        %856 = vmatpush.xpose.msra.mxu0 0.0
        %857 = vmatpush.xpose.msra.mxu0 0.0
        %858 = vmatpush.xpose.msra.mxu0 0.0
        %859 = vmatpush.xpose.msra.mxu0 0.0
        %860 = vmatpush.xpose.msra.mxu0 %v843
        %861 = vmatmul.f32.gmra.mxu0 %v841
        %v862 = vpop.f32.mrf.mxu0
        %v863 = vadd.f32 %v805, %v862
        %864 = vdwg.mxu0
        %v865 = vsel %vm811, %v835, -inf
        %866 = vmax.xlane.f32.xlu0 %v865
        %v867 = vpop.xlane.xlu0 %866
        %v868 = vsel %vm811, %v863, -inf
        %869 = vmax.xlane.f32.xlu0 %v868
        %v870 = vpop.xlane.xlu0 %869
        %v871 = vsub.f32 %v835, %v867
        %v872 = vsub.f32 %v863, %v870
        %v873 = vmul.f32 %v871, 1.442695
        %v874 = vpow.pop %v873
        %v875 = vmul.f32 %v872, 1.442695
        %v876 = vpow.pop %v875
        %v877 = vsel %vm811, %v874, 0.0
        %878 = vadd.xlane.f32.xlu0 %v877
        %v879 = vpop.xlane.xlu0 %878
        %v880 = vsel %vm811, %v876, 0.0
        %881 = vadd.xlane.f32.xlu0 %v880
        %v882 = vpop.xlane.xlu0 %881
        %v883 = vrcp.pop %v879
        %v884 = vrcp.pop %v882
        %v885 = vmul.f32 %v874, %v883
        %v886 = vmul.f32 %v876, %v884
        %887 = vrot.lane.b32.xlu0 %v795, 64
        %v888 = vpop.permute.xlu0 %887
        %v891 = vsel %vm811, %v885, 0
        %893 = vmatpush.msra.mxu0 0.0
        %894 = vmatpush.msra.mxu0 0.0
        %895 = vmatpush.msra.mxu0 0.0
        %896 = vmatpush.msra.mxu0 0.0
        %897 = vmatpush.msra.mxu0 0.0
        %898 = vmatpush.msra.mxu0 0.0
        %899 = vmatpush.msra.mxu0 0.0
        %900 = vmatpush.msra.mxu0 0.0
        %901 = vmatpush.msra.mxu0 0.0
        %902 = vmatpush.msra.mxu0 0.0
        %903 = vmatpush.msra.mxu0 0.0
        %904 = vmatpush.msra.mxu0 0.0
        %905 = vmatpush.msra.mxu0 0.0
        %906 = vmatpush.msra.mxu0 0.0
        %907 = vmatpush.msra.mxu0 0.0
        %908 = vmatpush.msra.mxu0 %v888
        %909 = vmatmul.f32.gmra.mxu0 %v891
        %v910 = vpop.f32.mrf.mxu0
        %v911 = vadd.f32 0.0, %v910
        %912 = vdwg.mxu0
        %913 = vrot.lane.b32.xlu0 %v798, 64
        %v914 = vpop.permute.xlu0 %913
        %v917 = vsel %vm811, %v886, 0
        %919 = vmatpush.msra.mxu0 0.0
        %920 = vmatpush.msra.mxu0 0.0
        %921 = vmatpush.msra.mxu0 0.0
        %922 = vmatpush.msra.mxu0 0.0
        %923 = vmatpush.msra.mxu0 0.0
        %924 = vmatpush.msra.mxu0 0.0
        %925 = vmatpush.msra.mxu0 0.0
        %926 = vmatpush.msra.mxu0 0.0
        %927 = vmatpush.msra.mxu0 0.0
        %928 = vmatpush.msra.mxu0 0.0
        %929 = vmatpush.msra.mxu0 0.0
        %930 = vmatpush.msra.mxu0 0.0
        %931 = vmatpush.msra.mxu0 0.0
        %932 = vmatpush.msra.mxu0 0.0
        %933 = vmatpush.msra.mxu0 0.0
        %934 = vmatpush.msra.mxu0 %v914
        %935 = vmatmul.f32.gmra.mxu0 %v917
        %v936 = vpop.f32.mrf.mxu0
        %v937 = vadd.f32 0.0, %v936
        %938 = vdwg.mxu0
        %939 = vst.msk [vmem:[#allocation2] sm:$0xff] %vm811, %v911
        %940 = vst.msk [vmem:[#allocation2 + $0x8] sm:$0xff] %vm811, %v937
        %941 = vrot.lane.b32.xlu0 %v800, 120
        %v942 = vpop.permute.xlu0 %941
        %943 = vrot.lane.b32.xlu0 %v795, 88
        %v944 = vpop.permute.xlu0 %943
        %v945 = vsel %vm811, %v942, 0
        %v947 = vsel %vm811, %v944, 0
        %949 = vmatpush.xpose.msra.mxu0 0.0
        %950 = vmatpush.xpose.msra.mxu0 0.0
        %951 = vmatpush.xpose.msra.mxu0 0.0
        %952 = vmatpush.xpose.msra.mxu0 0.0
        %953 = vmatpush.xpose.msra.mxu0 0.0
        %954 = vmatpush.xpose.msra.mxu0 0.0
        %955 = vmatpush.xpose.msra.mxu0 0.0
        %956 = vmatpush.xpose.msra.mxu0 0.0
        %957 = vmatpush.xpose.msra.mxu0 0.0
        %958 = vmatpush.xpose.msra.mxu0 0.0
        %959 = vmatpush.xpose.msra.mxu0 0.0
        %960 = vmatpush.xpose.msra.mxu0 0.0
        %961 = vmatpush.xpose.msra.mxu0 0.0
        %962 = vmatpush.xpose.msra.mxu0 0.0
        %963 = vmatpush.xpose.msra.mxu0 0.0
        %964 = vmatpush.xpose.msra.mxu0 %v947
        %965 = vmatmul.f32.gmra.mxu0 %v945
        %v966 = vpop.f32.mrf.mxu0
        %v967 = vadd.f32 %v804, %v966
        %968 = vdwg.mxu0
        %969 = vrot.lane.b32.xlu0 %v801, 120
        %v970 = vpop.permute.xlu0 %969
        %971 = vrot.lane.b32.xlu0 %v798, 88
        %v972 = vpop.permute.xlu0 %971
        %v973 = vsel %vm811, %v970, 0
        %v975 = vsel %vm811, %v972, 0
        %977 = vmatpush.xpose.msra.mxu0 0.0
        %978 = vmatpush.xpose.msra.mxu0 0.0
        %979 = vmatpush.xpose.msra.mxu0 0.0
        %980 = vmatpush.xpose.msra.mxu0 0.0
        %981 = vmatpush.xpose.msra.mxu0 0.0
        %982 = vmatpush.xpose.msra.mxu0 0.0
        %983 = vmatpush.xpose.msra.mxu0 0.0
        %984 = vmatpush.xpose.msra.mxu0 0.0
        %985 = vmatpush.xpose.msra.mxu0 0.0
        %986 = vmatpush.xpose.msra.mxu0 0.0
        %987 = vmatpush.xpose.msra.mxu0 0.0
        %988 = vmatpush.xpose.msra.mxu0 0.0
        %989 = vmatpush.xpose.msra.mxu0 0.0
        %990 = vmatpush.xpose.msra.mxu0 0.0
        %991 = vmatpush.xpose.msra.mxu0 0.0
        %992 = vmatpush.xpose.msra.mxu0 %v975
        %993 = vmatmul.f32.gmra.mxu0 %v973
        %v994 = vpop.f32.mrf.mxu0
        %v995 = vadd.f32 %v805, %v994
        %996 = vdwg.mxu0
        %v997 = vsel %vm811, %v967, -inf
        %998 = vmax.xlane.f32.xlu0 %v997
        %v999 = vpop.xlane.xlu0 %998
        %v1000 = vsel %vm811, %v995, -inf
        %1001 = vmax.xlane.f32.xlu0 %v1000
        %v1002 = vpop.xlane.xlu0 %1001
        %v1003 = vsub.f32 %v967, %v999
        %v1004 = vsub.f32 %v995, %v1002
        %v1005 = vmul.f32 %v1003, 1.442695
        %v1006 = vpow.pop %v1005
        %v1007 = vmul.f32 %v1004, 1.442695
        %v1008 = vpow.pop %v1007
        %v1009 = vsel %vm811, %v1006, 0.0
        %1010 = vadd.xlane.f32.xlu0 %v1009
        %v1011 = vpop.xlane.xlu0 %1010
        %v1012 = vsel %vm811, %v1008, 0.0
        %1013 = vadd.xlane.f32.xlu0 %v1012
        %v1014 = vpop.xlane.xlu0 %1013
        %v1015 = vrcp.pop %v1011
        %v1016 = vrcp.pop %v1014
        %v1017 = vmul.f32 %v1006, %v1015
        %v1018 = vmul.f32 %v1008, %v1016
        %1019 = vrot.lane.b32.xlu0 %v795, 56
        %v1020 = vpop.permute.xlu0 %1019
        %v1023 = vsel %vm811, %v1017, 0
        %1025 = vmatpush.msra.mxu0 0.0
        %1026 = vmatpush.msra.mxu0 0.0
        %1027 = vmatpush.msra.mxu0 0.0
        %1028 = vmatpush.msra.mxu0 0.0
        %1029 = vmatpush.msra.mxu0 0.0
        %1030 = vmatpush.msra.mxu0 0.0
        %1031 = vmatpush.msra.mxu0 0.0
        %1032 = vmatpush.msra.mxu0 0.0
        %1033 = vmatpush.msra.mxu0 0.0
        %1034 = vmatpush.msra.mxu0 0.0
        %1035 = vmatpush.msra.mxu0 0.0
        %1036 = vmatpush.msra.mxu0 0.0
        %1037 = vmatpush.msra.mxu0 0.0
        %1038 = vmatpush.msra.mxu0 0.0
        %1039 = vmatpush.msra.mxu0 0.0
        %1040 = vmatpush.msra.mxu0 %v1020
        %1041 = vmatmul.f32.gmra.mxu0 %v1023
        %v1042 = vpop.f32.mrf.mxu0
        %v1043 = vadd.f32 0.0, %v1042
        %1044 = vdwg.mxu0
        %1045 = vrot.lane.b32.xlu0 %v798, 56
        %v1046 = vpop.permute.xlu0 %1045
        %v1049 = vsel %vm811, %v1018, 0
        %1051 = vmatpush.msra.mxu0 0.0
        %1052 = vmatpush.msra.mxu0 0.0
        %1053 = vmatpush.msra.mxu0 0.0
        %1054 = vmatpush.msra.mxu0 0.0
        %1055 = vmatpush.msra.mxu0 0.0
        %1056 = vmatpush.msra.mxu0 0.0
        %1057 = vmatpush.msra.mxu0 0.0
        %1058 = vmatpush.msra.mxu0 0.0
        %1059 = vmatpush.msra.mxu0 0.0
        %1060 = vmatpush.msra.mxu0 0.0
        %1061 = vmatpush.msra.mxu0 0.0
        %1062 = vmatpush.msra.mxu0 0.0
        %1063 = vmatpush.msra.mxu0 0.0
        %1064 = vmatpush.msra.mxu0 0.0
        %1065 = vmatpush.msra.mxu0 0.0
        %1066 = vmatpush.msra.mxu0 %v1046
        %1067 = vmatmul.f32.gmra.mxu0 %v1049
        %v1068 = vpop.f32.mrf.mxu0
        %v1069 = vadd.f32 0.0, %v1068
        %1070 = vdwg.mxu0
        %1073 = vrot.lane.b32.xlu0 %v1043, 8
        %v1074 = vpop.permute.xlu0 %1073
        %1075 = vrot.lane.b32.xlu0 %v1069, 8
        %v1076 = vpop.permute.xlu0 %1075
        %vm1079 = vcmask 130112
        %1080 = vst.msk [vmem:[#allocation2] sm:$0xff] %vm1079, %v1074
        %1081 = vst.msk [vmem:[#allocation2 + $0x8] sm:$0xff] %vm1079, %v1076
        %1082 = vrot.lane.b32.xlu0 %v800, 112
        %v1083 = vpop.permute.xlu0 %1082
        %1084 = vrot.lane.b32.xlu0 %v795, 80
        %v1085 = vpop.permute.xlu0 %1084
        %v1086 = vsel %vm811, %v1083, 0
        %v1088 = vsel %vm811, %v1085, 0
        %1090 = vmatpush.xpose.msra.mxu0 0.0
        %1091 = vmatpush.xpose.msra.mxu0 0.0
        %1092 = vmatpush.xpose.msra.mxu0 0.0
        %1093 = vmatpush.xpose.msra.mxu0 0.0
        %1094 = vmatpush.xpose.msra.mxu0 0.0
        %1095 = vmatpush.xpose.msra.mxu0 0.0
        %1096 = vmatpush.xpose.msra.mxu0 0.0
        %1097 = vmatpush.xpose.msra.mxu0 0.0
        %1098 = vmatpush.xpose.msra.mxu0 0.0
        %1099 = vmatpush.xpose.msra.mxu0 0.0
        %1100 = vmatpush.xpose.msra.mxu0 0.0
        %1101 = vmatpush.xpose.msra.mxu0 0.0
        %1102 = vmatpush.xpose.msra.mxu0 0.0
        %1103 = vmatpush.xpose.msra.mxu0 0.0
        %1104 = vmatpush.xpose.msra.mxu0 0.0
        %1105 = vmatpush.xpose.msra.mxu0 %v1088
        %1106 = vmatmul.f32.gmra.mxu0 %v1086
        %v1107 = vpop.f32.mrf.mxu0
        %v1108 = vadd.f32 %v804, %v1107
        %1109 = vdwg.mxu0
        %1110 = vrot.lane.b32.xlu0 %v801, 112
        %v1111 = vpop.permute.xlu0 %1110
        %1112 = vrot.lane.b32.xlu0 %v798, 80
        %v1113 = vpop.permute.xlu0 %1112
        %v1114 = vsel %vm811, %v1111, 0
        %v1116 = vsel %vm811, %v1113, 0
        %1118 = vmatpush.xpose.msra.mxu0 0.0
        %1119 = vmatpush.xpose.msra.mxu0 0.0
        %1120 = vmatpush.xpose.msra.mxu0 0.0
        %1121 = vmatpush.xpose.msra.mxu0 0.0
        %1122 = vmatpush.xpose.msra.mxu0 0.0
        %1123 = vmatpush.xpose.msra.mxu0 0.0
        %1124 = vmatpush.xpose.msra.mxu0 0.0
        %1125 = vmatpush.xpose.msra.mxu0 0.0
        %1126 = vmatpush.xpose.msra.mxu0 0.0
        %1127 = vmatpush.xpose.msra.mxu0 0.0
        %1128 = vmatpush.xpose.msra.mxu0 0.0
        %1129 = vmatpush.xpose.msra.mxu0 0.0
        %1130 = vmatpush.xpose.msra.mxu0 0.0
        %1131 = vmatpush.xpose.msra.mxu0 0.0
        %1132 = vmatpush.xpose.msra.mxu0 0.0
        %1133 = vmatpush.xpose.msra.mxu0 %v1116
        %1134 = vmatmul.f32.gmra.mxu0 %v1114
        %v1135 = vpop.f32.mrf.mxu0
        %v1136 = vadd.f32 %v805, %v1135
        %1137 = vdwg.mxu0
        %v1138 = vsel %vm811, %v1108, -inf
        %1139 = vmax.xlane.f32.xlu0 %v1138
        %v1140 = vpop.xlane.xlu0 %1139
        %v1141 = vsel %vm811, %v1136, -inf
        %1142 = vmax.xlane.f32.xlu0 %v1141
        %v1143 = vpop.xlane.xlu0 %1142
        %v1144 = vsub.f32 %v1108, %v1140
        %v1145 = vsub.f32 %v1136, %v1143
        %v1146 = vmul.f32 %v1144, 1.442695
        %v1147 = vpow.pop %v1146
        %v1148 = vmul.f32 %v1145, 1.442695
        %v1149 = vpow.pop %v1148
        %v1150 = vsel %vm811, %v1147, 0.0
        %1151 = vadd.xlane.f32.xlu0 %v1150
        %v1152 = vpop.xlane.xlu0 %1151
        %v1153 = vsel %vm811, %v1149, 0.0
        %1154 = vadd.xlane.f32.xlu0 %v1153
        %v1155 = vpop.xlane.xlu0 %1154
        %v1156 = vrcp.pop %v1152
        %v1157 = vrcp.pop %v1155
        %v1158 = vmul.f32 %v1147, %v1156
        %v1159 = vmul.f32 %v1149, %v1157
        %1160 = vrot.lane.b32.xlu0 %v795, 48
        %v1161 = vpop.permute.xlu0 %1160
        %v1164 = vsel %vm811, %v1158, 0
        %1166 = vmatpush.msra.mxu0 0.0
        %1167 = vmatpush.msra.mxu0 0.0
        %1168 = vmatpush.msra.mxu0 0.0
        %1169 = vmatpush.msra.mxu0 0.0
        %1170 = vmatpush.msra.mxu0 0.0
        %1171 = vmatpush.msra.mxu0 0.0
        %1172 = vmatpush.msra.mxu0 0.0
        %1173 = vmatpush.msra.mxu0 0.0
        %1174 = vmatpush.msra.mxu0 0.0
        %1175 = vmatpush.msra.mxu0 0.0
        %1176 = vmatpush.msra.mxu0 0.0
        %1177 = vmatpush.msra.mxu0 0.0
        %1178 = vmatpush.msra.mxu0 0.0
        %1179 = vmatpush.msra.mxu0 0.0
        %1180 = vmatpush.msra.mxu0 0.0
        %1181 = vmatpush.msra.mxu0 %v1161
        %1182 = vmatmul.f32.gmra.mxu0 %v1164
        %v1183 = vpop.f32.mrf.mxu0
        %v1184 = vadd.f32 0.0, %v1183
        %1185 = vdwg.mxu0
        %1186 = vrot.lane.b32.xlu0 %v798, 48
        %v1187 = vpop.permute.xlu0 %1186
        %v1190 = vsel %vm811, %v1159, 0
        %1192 = vmatpush.msra.mxu0 0.0
        %1193 = vmatpush.msra.mxu0 0.0
        %1194 = vmatpush.msra.mxu0 0.0
        %1195 = vmatpush.msra.mxu0 0.0
        %1196 = vmatpush.msra.mxu0 0.0
        %1197 = vmatpush.msra.mxu0 0.0
        %1198 = vmatpush.msra.mxu0 0.0
        %1199 = vmatpush.msra.mxu0 0.0
        %1200 = vmatpush.msra.mxu0 0.0
        %1201 = vmatpush.msra.mxu0 0.0
        %1202 = vmatpush.msra.mxu0 0.0
        %1203 = vmatpush.msra.mxu0 0.0
        %1204 = vmatpush.msra.mxu0 0.0
        %1205 = vmatpush.msra.mxu0 0.0
        %1206 = vmatpush.msra.mxu0 0.0
        %1207 = vmatpush.msra.mxu0 %v1187
        %1208 = vmatmul.f32.gmra.mxu0 %v1190
        %v1209 = vpop.f32.mrf.mxu0
        %v1210 = vadd.f32 0.0, %v1209
        %1211 = vdwg.mxu0
        %1214 = vrot.lane.b32.xlu0 %v1184, 16
        %v1215 = vpop.permute.xlu0 %1214
        %1216 = vrot.lane.b32.xlu0 %v1210, 16
        %v1217 = vpop.permute.xlu0 %1216
        %vm1220 = vcmask 195712
        %1221 = vst.msk [vmem:[#allocation2] sm:$0xff] %vm1220, %v1215
        %1222 = vst.msk [vmem:[#allocation2 + $0x8] sm:$0xff] %vm1220, %v1217
        %1223 = vrot.lane.b32.xlu0 %v800, 104
        %v1224 = vpop.permute.xlu0 %1223
        %1225 = vrot.lane.b32.xlu0 %v795, 72
        %v1226 = vpop.permute.xlu0 %1225
        %v1227 = vsel %vm811, %v1224, 0
        %v1229 = vsel %vm811, %v1226, 0
        %1231 = vmatpush.xpose.msra.mxu0 0.0
        %1232 = vmatpush.xpose.msra.mxu0 0.0
        %1233 = vmatpush.xpose.msra.mxu0 0.0
        %1234 = vmatpush.xpose.msra.mxu0 0.0
        %1235 = vmatpush.xpose.msra.mxu0 0.0
        %1236 = vmatpush.xpose.msra.mxu0 0.0
        %1237 = vmatpush.xpose.msra.mxu0 0.0
        %1238 = vmatpush.xpose.msra.mxu0 0.0
        %1239 = vmatpush.xpose.msra.mxu0 0.0
        %1240 = vmatpush.xpose.msra.mxu0 0.0
        %1241 = vmatpush.xpose.msra.mxu0 0.0
        %1242 = vmatpush.xpose.msra.mxu0 0.0
        %1243 = vmatpush.xpose.msra.mxu0 0.0
        %1244 = vmatpush.xpose.msra.mxu0 0.0
        %1245 = vmatpush.xpose.msra.mxu0 0.0
        %1246 = vmatpush.xpose.msra.mxu0 %v1229
        %1247 = vmatmul.f32.gmra.mxu0 %v1227
        %v1248 = vpop.f32.mrf.mxu0
        %v1249 = vadd.f32 %v804, %v1248
        %1250 = vdwg.mxu0
        %1251 = vrot.lane.b32.xlu0 %v801, 104
        %v1252 = vpop.permute.xlu0 %1251
        %1253 = vrot.lane.b32.xlu0 %v798, 72
        %v1254 = vpop.permute.xlu0 %1253
        %v1255 = vsel %vm811, %v1252, 0
        %v1257 = vsel %vm811, %v1254, 0
        %1259 = vmatpush.xpose.msra.mxu0 0.0
        %1260 = vmatpush.xpose.msra.mxu0 0.0
        %1261 = vmatpush.xpose.msra.mxu0 0.0
        %1262 = vmatpush.xpose.msra.mxu0 0.0
        %1263 = vmatpush.xpose.msra.mxu0 0.0
        %1264 = vmatpush.xpose.msra.mxu0 0.0
        %1265 = vmatpush.xpose.msra.mxu0 0.0
        %1266 = vmatpush.xpose.msra.mxu0 0.0
        %1267 = vmatpush.xpose.msra.mxu0 0.0
        %1268 = vmatpush.xpose.msra.mxu0 0.0
        %1269 = vmatpush.xpose.msra.mxu0 0.0
        %1270 = vmatpush.xpose.msra.mxu0 0.0
        %1271 = vmatpush.xpose.msra.mxu0 0.0
        %1272 = vmatpush.xpose.msra.mxu0 0.0
        %1273 = vmatpush.xpose.msra.mxu0 0.0
        %1274 = vmatpush.xpose.msra.mxu0 %v1257
        %1275 = vmatmul.f32.gmra.mxu0 %v1255
        %v1276 = vpop.f32.mrf.mxu0
        %v1277 = vadd.f32 %v805, %v1276
        %1278 = vdwg.mxu0
        %v1279 = vsel %vm811, %v1249, -inf
        %1280 = vmax.xlane.f32.xlu0 %v1279
        %v1281 = vpop.xlane.xlu0 %1280
        %v1282 = vsel %vm811, %v1277, -inf
        %1283 = vmax.xlane.f32.xlu0 %v1282
        %v1284 = vpop.xlane.xlu0 %1283
        %v1285 = vsub.f32 %v1249, %v1281
        %v1286 = vsub.f32 %v1277, %v1284
        %v1287 = vmul.f32 %v1285, 1.442695
        %v1288 = vpow.pop %v1287
        %v1289 = vmul.f32 %v1286, 1.442695
        %v1290 = vpow.pop %v1289
        %v1291 = vsel %vm811, %v1288, 0.0
        %1292 = vadd.xlane.f32.xlu0 %v1291
        %v1293 = vpop.xlane.xlu0 %1292
        %v1294 = vsel %vm811, %v1290, 0.0
        %1295 = vadd.xlane.f32.xlu0 %v1294
        %v1296 = vpop.xlane.xlu0 %1295
        %v1297 = vrcp.pop %v1293
        %v1298 = vrcp.pop %v1296
        %v1299 = vmul.f32 %v1288, %v1297
        %v1300 = vmul.f32 %v1290, %v1298
        %1301 = vrot.lane.b32.xlu0 %v795, 40
        %v1302 = vpop.permute.xlu0 %1301
        %v1305 = vsel %vm811, %v1299, 0
        %1307 = vmatpush.msra.mxu0 0.0
        %1308 = vmatpush.msra.mxu0 0.0
        %1309 = vmatpush.msra.mxu0 0.0
        %1310 = vmatpush.msra.mxu0 0.0
        %1311 = vmatpush.msra.mxu0 0.0
        %1312 = vmatpush.msra.mxu0 0.0
        %1313 = vmatpush.msra.mxu0 0.0
        %1314 = vmatpush.msra.mxu0 0.0
        %1315 = vmatpush.msra.mxu0 0.0
        %1316 = vmatpush.msra.mxu0 0.0
        %1317 = vmatpush.msra.mxu0 0.0
        %1318 = vmatpush.msra.mxu0 0.0
        %1319 = vmatpush.msra.mxu0 0.0
        %1320 = vmatpush.msra.mxu0 0.0
        %1321 = vmatpush.msra.mxu0 0.0
        %1322 = vmatpush.msra.mxu0 %v1302
        %1323 = vmatmul.f32.gmra.mxu0 %v1305
        %v1324 = vpop.f32.mrf.mxu0
        %v1325 = vadd.f32 0.0, %v1324
        %1326 = vdwg.mxu0
        %1327 = vrot.lane.b32.xlu0 %v798, 40
        %v1328 = vpop.permute.xlu0 %1327
        %v1331 = vsel %vm811, %v1300, 0
        %1333 = vmatpush.msra.mxu0 0.0
        %1334 = vmatpush.msra.mxu0 0.0
        %1335 = vmatpush.msra.mxu0 0.0
        %1336 = vmatpush.msra.mxu0 0.0
        %1337 = vmatpush.msra.mxu0 0.0
        %1338 = vmatpush.msra.mxu0 0.0
        %1339 = vmatpush.msra.mxu0 0.0
        %1340 = vmatpush.msra.mxu0 0.0
        %1341 = vmatpush.msra.mxu0 0.0
        %1342 = vmatpush.msra.mxu0 0.0
        %1343 = vmatpush.msra.mxu0 0.0
        %1344 = vmatpush.msra.mxu0 0.0
        %1345 = vmatpush.msra.mxu0 0.0
        %1346 = vmatpush.msra.mxu0 0.0
        %1347 = vmatpush.msra.mxu0 0.0
        %1348 = vmatpush.msra.mxu0 %v1328
        %1349 = vmatmul.f32.gmra.mxu0 %v1331
        %v1350 = vpop.f32.mrf.mxu0
        %v1351 = vadd.f32 0.0, %v1350
        %1352 = vdwg.mxu0
        %1355 = vrot.lane.b32.xlu0 %v1325, 24
        %v1356 = vpop.permute.xlu0 %1355
        %1357 = vrot.lane.b32.xlu0 %v1351, 24
        %v1358 = vpop.permute.xlu0 %1357
        %vm1361 = vcmask 261312
        %1362 = vst.msk [vmem:[#allocation2] sm:$0xff] %vm1361, %v1356
        %1363 = vst.msk [vmem:[#allocation2 + $0x8] sm:$0xff] %vm1361, %v1358
        %v1364 = vld [vmem:[#allocation2] sm:$0xff]
        %v1365 = vld [vmem:[#allocation2 + $0x8] sm:$0xff]
        %v1366 = vld [vmem:[%s725] sm:$0xff]
        %v1367 = vld [vmem:[%s725 + $0x8] sm:$0xff]
        %v1368 = vld [vmem:[%s725 + $0x10] sm:$0xff]
        %v1369 = vld [vmem:[%s725 + $0x18] sm:$0xff]
        %v1370 = vld [vmem:[%s610] sm:$0x1]
        %v1372 = vperm.slane %v1370, 0
        %v1375 = vsel %vm770, %v1364, 0
        %v1378 = vsel %vm770, %v1365, 0
        %1380 = vmatpush.msra.mxu0 0.0
        %1381 = vmatpush.msra.mxu0 0.0
        %1382 = vmatpush.msra.mxu0 0.0
        %1383 = vmatpush.msra.mxu0 0.0
        %1384 = vmatpush.msra.mxu0 0.0
        %1385 = vmatpush.msra.mxu0 0.0
        %1386 = vmatpush.msra.mxu0 0.0
        %1387 = vmatpush.msra.mxu0 0.0
        %1388 = vmatpush.msra.mxu0 0.0
        %1389 = vmatpush.msra.mxu0 0.0
        %1390 = vmatpush.msra.mxu0 0.0
        %1391 = vmatpush.msra.mxu0 0.0
        %1392 = vmatpush.msra.mxu0 %v1369
        %1393 = vmatpush.msra.mxu0 %v1368
        %1394 = vmatpush.msra.mxu0 %v1367
        %1395 = vmatpush.msra.mxu0 %v1366
        %1396 = vmatmul.f32.gmra.mxu0 %v1375
        %v1397 = vpop.f32.mrf.mxu0
        %v1398 = vadd.f32 %v1372, %v1397
        %1399 = vmatmul.f32.gmra.mxu0 %v1378
        %v1400 = vpop.f32.mrf.mxu0
        %v1401 = vadd.f32 %v1372, %v1400
        %1402 = vdwg.mxu0
        %v1403 = vadd.f32 %v758, %v1398
        %v1404 = vadd.f32 %v759, %v1401
        %v1405 = vld [vmem:[%s728] sm:$0x1]
        %v1406 = vld [vmem:[%s619] sm:$0x1]
        %v1407 = vsel %vm770, %v1403, 0.0
        %1408 = vadd.xlane.f32.xlu0 %v1407
        %v1409 = vpop.xlane.xlu0 %1408
        %v1410 = vsel %vm770, %v1404, 0.0
        %1411 = vadd.xlane.f32.xlu0 %v1410
        %v1412 = vpop.xlane.xlu0 %1411
        %v1413 = vrcp.pop 32.0
        %v1414 = vmul.f32 32.0, %v1413
        %v1415 = vsub.f32 1.0, %v1414
        %v1416 = vmul.f32 %v1413, %v1415
        %v1417 = vadd.f32 %v1413, %v1416
        %vm1418 = vweird.f32 %v1413
        %v1419 = vsel %vm1418, %v1413, %v1417
        %v1420 = vmul.f32 %v1409, %v1419
        %v1421 = vmul.f32 %v1412, %v1419
        %v1422 = vsub.f32 %v1403, %v1420
        %v1423 = vsub.f32 %v1404, %v1421
        %v1424 = vmul.f32 %v1422, %v1422
        %v1425 = vmul.f32 %v1423, %v1423
        %v1426 = vsel %vm770, %v1424, 0.0
        %1427 = vadd.xlane.f32.xlu0 %v1426
        %v1428 = vpop.xlane.xlu0 %1427
        %v1429 = vsel %vm770, %v1425, 0.0
        %1430 = vadd.xlane.f32.xlu0 %v1429
        %v1431 = vpop.xlane.xlu0 %1430
        %v1432 = vmul.f32 %v1428, %v1419
        %v1433 = vmul.f32 %v1431, %v1419
        %v1434 = vadd.f32 %v1432, 1e-05
        %v1435 = vadd.f32 %v1433, 1e-05
        %v1436 = vrsqrt.pop %v1434
        %v1437 = vmul.f32 %v1436, %v1434
        %v1438 = vmul.f32 %v1437, %v1436
        %v1439 = vmul.f32 0.5, %v1438
        %v1440 = vsub.f32 1.5, %v1439
        %v1441 = vmul.f32 %v1436, %v1440
        %vm1442 = vweird.f32 %v1434
        %vm1443 = vweird.f32 %v1436
        %vm1444 = vmor %vm1442, %vm1443
        %v1445 = vsel %vm1444, %v1436, %v1441
        %v1446 = vrsqrt.pop %v1435
        %v1447 = vmul.f32 %v1446, %v1435
        %v1448 = vmul.f32 %v1447, %v1446
        %v1449 = vmul.f32 0.5, %v1448
        %v1450 = vsub.f32 1.5, %v1449
        %v1451 = vmul.f32 %v1446, %v1450
        %vm1452 = vweird.f32 %v1435
        %vm1453 = vweird.f32 %v1446
        %vm1454 = vmor %vm1452, %vm1453
        %v1455 = vsel %vm1454, %v1446, %v1451
        %v1456 = vmul.f32 %v1422, %v1445
        %v1457 = vmul.f32 %v1423, %v1455
        %v1459 = vperm.slane %v1405, 0
        %v1461 = vmul.f32 %v1456, %v1459
        %v1462 = vmul.f32 %v1457, %v1459
        %v1464 = vperm.slane %v1406, 0
        %v1466 = vadd.f32 %v1461, %v1464
        %v1467 = vadd.f32 %v1462, %v1464
        %v1468 = vld [vmem:[%s733] sm:$0xff]
        %v1469 = vld [vmem:[%s733 + $0x8] sm:$0xff]
        %v1470 = vld [vmem:[%s733 + $0x10] sm:$0xff]
        %v1471 = vld [vmem:[%s733 + $0x18] sm:$0xff]
        %v1472 = vld [vmem:[%s736] sm:$0x1]
        %v1474 = vperm.slane %v1472, 0
        %v1477 = vsel %vm770, %v1466, 0
        %v1480 = vsel %vm770, %v1467, 0
        %1482 = vmatpush.msra.mxu0 0.0
        %1483 = vmatpush.msra.mxu0 0.0
        %1484 = vmatpush.msra.mxu0 0.0
        %1485 = vmatpush.msra.mxu0 0.0
        %1486 = vmatpush.msra.mxu0 0.0
        %1487 = vmatpush.msra.mxu0 0.0
        %1488 = vmatpush.msra.mxu0 0.0
        %1489 = vmatpush.msra.mxu0 0.0
        %1490 = vmatpush.msra.mxu0 0.0
        %1491 = vmatpush.msra.mxu0 0.0
        %1492 = vmatpush.msra.mxu0 0.0
        %1493 = vmatpush.msra.mxu0 0.0
        %1494 = vmatpush.msra.mxu0 %v1471
        %1495 = vmatpush.msra.mxu0 %v1470
        %1496 = vmatpush.msra.mxu0 %v1469
        %1497 = vmatpush.msra.mxu0 %v1468
        %1498 = vmatmul.f32.gmra.mxu0 %v1477
        %v1499 = vpop.f32.mrf.mxu0
        %v1500 = vadd.f32 %v1474, %v1499
        %1501 = vmatmul.f32.gmra.mxu0 %v1480
        %v1502 = vpop.f32.mrf.mxu0
        %v1503 = vadd.f32 %v1474, %v1502
        %1504 = vdwg.mxu0
        %v1505 = vmax.f32 %v1500, 0.0
        %v1506 = vmax.f32 %v1503, 0.0
        %v1507 = vld [vmem:[%s741] sm:$0xff]
        %v1508 = vld [vmem:[%s741 + $0x8] sm:$0xff]
        %v1509 = vld [vmem:[%s741 + $0x10] sm:$0xff]
        %v1510 = vld [vmem:[%s741 + $0x18] sm:$0xff]
        %v1511 = vld [vmem:[%s741 + $0x20] sm:$0xff]
        %v1512 = vld [vmem:[%s741 + $0x28] sm:$0xff]
        %v1513 = vld [vmem:[%s741 + $0x30] sm:$0xff]
        %v1514 = vld [vmem:[%s741 + $0x38] sm:$0xff]
        %v1515 = vld [vmem:[%s744] sm:$0x1]
        %v1517 = vperm.slane %v1515, 0
        %vm1519 = vcmask 523264
        %v1521 = vsel %vm1519, %v1505, 0
        %v1524 = vsel %vm1519, %v1506, 0
        %1526 = vmatpush.msra.mxu0 0.0
        %1527 = vmatpush.msra.mxu0 0.0
        %1528 = vmatpush.msra.mxu0 0.0
        %1529 = vmatpush.msra.mxu0 0.0
        %1530 = vmatpush.msra.mxu0 0.0
        %1531 = vmatpush.msra.mxu0 0.0
        %1532 = vmatpush.msra.mxu0 0.0
        %1533 = vmatpush.msra.mxu0 0.0
        %1534 = vmatpush.msra.mxu0 %v1514
        %1535 = vmatpush.msra.mxu0 %v1513
        %1536 = vmatpush.msra.mxu0 %v1512
        %1537 = vmatpush.msra.mxu0 %v1511
        %1538 = vmatpush.msra.mxu0 %v1510
        %1539 = vmatpush.msra.mxu0 %v1509
        %1540 = vmatpush.msra.mxu0 %v1508
        %1541 = vmatpush.msra.mxu0 %v1507
        %1542 = vmatmul.f32.gmra.mxu0 %v1521
        %v1543 = vpop.f32.mrf.mxu0
        %v1544 = vadd.f32 %v1517, %v1543
        %1545 = vmatmul.f32.gmra.mxu0 %v1524
        %v1546 = vpop.f32.mrf.mxu0
        %v1547 = vadd.f32 %v1517, %v1546
        %1548 = vdwg.mxu0
        %v1549 = vadd.f32 %v1466, %v1544
        %v1550 = vadd.f32 %v1467, %v1547
        %v1551 = vld [vmem:[%s747] sm:$0x1]
        %v1552 = vld [vmem:[%s628] sm:$0x1]
        %v1553 = vsel %vm770, %v1549, 0.0
        %1554 = vadd.xlane.f32.xlu0 %v1553
        %v1555 = vpop.xlane.xlu0 %1554
        %v1556 = vsel %vm770, %v1550, 0.0
        %1557 = vadd.xlane.f32.xlu0 %v1556
        %v1558 = vpop.xlane.xlu0 %1557
        %v1559 = vmul.f32 %v1555, %v1419
        %v1560 = vmul.f32 %v1558, %v1419
        %v1561 = vsub.f32 %v1549, %v1559
        %v1562 = vsub.f32 %v1550, %v1560
        %v1563 = vmul.f32 %v1561, %v1561
        %v1564 = vmul.f32 %v1562, %v1562
        %v1565 = vsel %vm770, %v1563, 0.0
        %1566 = vadd.xlane.f32.xlu0 %v1565
        %v1567 = vpop.xlane.xlu0 %1566
        %v1568 = vsel %vm770, %v1564, 0.0
        %1569 = vadd.xlane.f32.xlu0 %v1568
        %v1570 = vpop.xlane.xlu0 %1569
        %v1571 = vmul.f32 %v1567, %v1419
        %v1572 = vmul.f32 %v1570, %v1419
        %v1573 = vadd.f32 %v1571, 1e-05
        %v1574 = vadd.f32 %v1572, 1e-05
        %v1575 = vrsqrt.pop %v1573
        %v1576 = vmul.f32 %v1575, %v1573
        %v1577 = vmul.f32 %v1576, %v1575
        %v1578 = vmul.f32 0.5, %v1577
        %v1579 = vsub.f32 1.5, %v1578
        %v1580 = vmul.f32 %v1575, %v1579
        %vm1581 = vweird.f32 %v1573
        %vm1582 = vweird.f32 %v1575
        %vm1583 = vmor %vm1581, %vm1582
        %v1584 = vsel %vm1583, %v1575, %v1580
        %v1585 = vrsqrt.pop %v1574
        %v1586 = vmul.f32 %v1585, %v1574
        %v1587 = vmul.f32 %v1586, %v1585
        %v1588 = vmul.f32 0.5, %v1587
        %v1589 = vsub.f32 1.5, %v1588
        %v1590 = vmul.f32 %v1585, %v1589
        %vm1591 = vweird.f32 %v1574
        %vm1592 = vweird.f32 %v1585
        %vm1593 = vmor %vm1591, %vm1592
        %v1594 = vsel %vm1593, %v1585, %v1590
        %v1595 = vmul.f32 %v1561, %v1584
        %v1596 = vmul.f32 %v1562, %v1594
        %v1598 = vperm.slane %v1551, 0
        %v1600 = vmul.f32 %v1595, %v1598
        %v1601 = vmul.f32 %v1596, %v1598
        %v1603 = vperm.slane %v1552, 0
        %v1605 = vadd.f32 %v1600, %v1603
        %v1606 = vadd.f32 %v1601, %v1603
        %1607 = vst.msk [vmem:[#allocation11] sm:$0xff] %vm770, %v1605
        %1608 = vst.msk [vmem:[#allocation11 + $0x8] sm:$0xff] %vm770, %v1606
        // Predicated region
        $region101: #{tpu_custom_call.1} parent=75 // pred_check
          %p1609 = pneg %p422
        $region102: #{tpu_custom_call.1} parent=75 // pred_check_branch
          %1611 = sbr.rel (%p1609) target = $region104
        $region103: #{tpu_custom_call.1} parent=75 // pred_region
          %s1612 = smul.u32 2, %s32
          %1614 = vsyncadd [#allocation5], 0
          %s1615 = smul.addr %s1612, 8
          %s1616 = scalar_lea.hbm %s14, %s1615
          %s1617 = sshll.u32 [#allocation11], 4
          %s1618 = int_to_ptr.vmem [resolvable:$true] %s1617
          %s1619 = sshll.u32 %s1616, 4
          %s1620 = int_to_ptr.hbm [resolvable:$true] %s1619
          %1625 = dma.vmem_to_hbm [thread:$0]  %s1618, 256, %s1620, [#allocation5], 128, 128, 8
        $region104: #{tpu_custom_call.1} parent=75 // pred_fallthru
          _
        // Predicated region
        $region105: #{tpu_custom_call.1} parent=75 // pred_check
          %p1626 = pneg %p422
        $region106: #{tpu_custom_call.1} parent=75 // pred_check_branch
          %1628 = sbr.rel (%p1626) target = $region108
        $region107: #{tpu_custom_call.1} parent=75 // pred_region
          %1630 = dma.done [#allocation5], 256
        $region108: #{tpu_custom_call.1} parent=75 // pred_fallthru
          _
      $region76: #{tpu_custom_call.1} parent=5 // pred_fallthru
        _
      %p1631 = scmp.le.s32.totalorder 2, %s23
      // Predicated region
      $region109: #{tpu_custom_call.1} parent=5 // pred_check
        %p1632 = pneg %p1631
      $region110: #{tpu_custom_call.1} parent=5 // pred_check_branch
        %1634 = sbr.rel (%p1632) target = $region112
      $region111: #{tpu_custom_call.1} parent=5 // pred_region
        %s1635 = ssub.s32 %s23, 2
      $region112: #{tpu_custom_call.1} parent=5 // pred_fallthru
        _
    $region6: #{tpu_custom_call.1} parent=1 // loop_footer
      %s27 = sadd.s32 1, %s23
    $region7: #{tpu_custom_call.1} parent=1 // loop_footer_branch
      %22 = sbr.rel target = $region3
    $region8: #{tpu_custom_call.1} parent=1 // loop_exit
      _
    %1636 = vsyncpa [#allocation4], 1
    %s1637 = scalar_lea.sflag [#allocation4], 1
    %1638 = vsyncpa %s1637, 1
    %1639 = vsyncpa [#allocation7], 1
    %1640 = vsyncpa [#allocation5], 1
    %s1641 = scalar_lea.sflag [#allocation5], 1
    %1642 = vsyncpa %s1641, 1

</llo_original>
